<compile_context>
chip_gen: v5e
topology: v5e:2x2
jax: 0.10.0
libtpu: 0.0.40
codegen_flags: <defaults>
</compile_context>

<pallas_src>
import functools

import jax
import jax.numpy as jnp
from jax.experimental import pallas as pl
from jax.experimental.pallas import tpu as pltpu

EPS = 1e-5  # PyTorch BatchNorm1d default eps


# ------------------------------- kernel -------------------------------------


def fcn_kernel(x_ref,
               w1_ref, t1_ref,
               w2_ref, t2_ref,
               w3_ref, t3_ref,
               wf_ref, tf_ref,
               wc_ref, bc_ref,
               out_ref, *, L, kss, pads):
    rows = x_ref.shape[0]          # TILE_B * L (static)
    tile_b = rows // L

    # Hoisted once per kernel invocation; shared by every tap of every layer.
    pos = jax.lax.broadcasted_iota(jnp.int32, (rows, 1), 0) % L

    def conv_bn_relu(x2d, w_ref, t_ref, ks, pad):
        """Same-padded Conv1d + folded eval-BN + ReLU on flattened rows.

        Row r belongs to batch element r // L, position r % L.  Tap offset
        o = k - pad is realized with an XLU roll; rows whose source position
        falls outside [0, L) (batch seams and tile-edge wraps) are zeroed via
        the pos-based mask (the roll wrap lands exactly on masked rows because
        the tile is a whole number of batch elements).
        """
        if ks == 1:
            win = x2d
        else:
            taps = []
            for k in range(ks):                       # static tap loop -> im2col
                o = k - pad
                if o == 0:
                    taps.append(x2d)
                else:
                    s = pltpu.roll(x2d, shift=(-o) % rows, axis=0)
                    valid = jnp.logical_and(pos >= -o, pos < L - o)
                    taps.append(jnp.where(valid, s, 0.0))
            win = jnp.concatenate(taps, axis=-1)      # (rows, ks*Cin)
        y = jnp.dot(win.astype(jnp.bfloat16), w_ref[...],
                    preferred_element_type=jnp.float32)   # single MXU matmul
        return jnp.maximum(y + t_ref[...], 0.0)      # bias+BN folded, ReLU

    h = conv_bn_relu(x_ref[...], w1_ref, t1_ref, kss[0], pads[0])
    h = conv_bn_relu(h, w2_ref, t2_ref, kss[1], pads[1])
    h = conv_bn_relu(h, w3_ref, t3_ref, kss[2], pads[2])     # (rows, 128)

    # AdaptiveMaxPool1d(1): global max over length per batch element.
    pooled = jnp.max(h.reshape(tile_b, L, h.shape[-1]), axis=1)  # (tile_b, 128)

    # signal_feature: Linear(128, 64) + folded eval-BN + ReLU (Dropout = id).
    f = jnp.dot(pooled.astype(jnp.bfloat16), wf_ref[...],
                preferred_element_type=jnp.float32)
    f = jnp.maximum(f + tf_ref[...], 0.0)

    # classifier: Linear(64, 1); weight zero-padded to 64 cols (col 0 real) so
    # the output block stays a lane-dense (tile_b, 128) store.
    logit = jnp.dot(f.astype(jnp.bfloat16), wc_ref[...],
                    preferred_element_type=jnp.float32) + bc_ref[...]

    out_ref[:, :64] = f
    out_ref[:, 64:] = logit


# ------------------------------- wrapper ------------------------------------


def _pick_tile_b(btot, L, cin, chans, kss, budget_bytes=12 * 1024 * 1024):
    """Batch elements per grid step, multiple of 8 (sublane-aligned output),
    sized so the per-tile live set stays well under scoped VMEM on v5e/v6e/v7x
    (v7x has only 64 MiB physical VMEM per TensorCore)."""
    c1, c2, c3 = chans
    ks1, ks2, ks3 = kss
    win_cols = max(ks1 * cin, ks2 * c1, ks3 * c2)
    # f32 activations + f32/bf16 im2col window + slack for (rows,1) temporaries.
    per_row = 4 * (cin + c1 + c2 + c3) + 6 * win_cols + 512
    tile_rows = max(L, budget_bytes // max(per_row, 1))
    tile_b = max(8, (tile_rows // L) // 8 * 8)
    # Never tile finer than the (sublane-padded) total batch.
    tile_b = min(tile_b, max(8, pl.cdiv(btot, 8) * 8))
    return tile_b


def fcn_forward(signal_ncl, random_ncl, params, kss, pads):
    """Mirrors FCN.forward(signal, random_s) in eval mode (random_s not None)."""
    B, Cin, L = signal_ncl.shape
    assert all(k % 2 == 1 for k in kss), "same-length conv requires odd ks"
    assert all(p < L for p in pads)

    C1 = params["w1"].shape[-1]
    C2 = params["w2"].shape[-1]
    C3 = params["w3"].shape[-1]

    # Fuse signal & random along batch; NCL -> NLC -> flat (2B*L, Cin) rows.
    btot = 2 * B
    x = jnp.concatenate([signal_ncl, random_ncl], axis=0).astype(jnp.float32)
    x = jnp.transpose(x, (0, 2, 1)).reshape(btot * L, Cin)

    tile_b = _pick_tile_b(btot, L, Cin, (C1, C2, C3), kss)
    btot_pad = pl.cdiv(btot, tile_b) * tile_b
    if btot_pad != btot:
        x = jnp.pad(x, ((0, (btot_pad - btot) * L), (0, 0)))
    n_tiles = btot_pad // tile_b
    tile_rows = tile_b * L

    # Fold eval-mode BatchNorm into the matmul weights (w' = w*scale,
    # shift' = b*scale + shift); cast matmul weights to bf16 for the MXU.
    def fold_conv(w, b, s, t):
        ks, ci, co = w.shape
        wf = (w * s.reshape(1, 1, co)).reshape(ks * ci, co).astype(jnp.bfloat16)
        return wf, (b * s + t).astype(jnp.float32)

    w1, t1 = fold_conv(params["w1"], params["b1"], params["s1"], params["t1"])
    w2, t2 = fold_conv(params["w2"], params["b2"], params["s2"], params["t2"])
    w3, t3 = fold_conv(params["w3"], params["b3"], params["s3"], params["t3"])
    wf = (params["wf"] * params["sf"]).astype(jnp.bfloat16)          # (C3, 64)
    tf = (params["bf"] * params["sf"] + params["tf"]).astype(jnp.float32)
    wc = jnp.pad(params["wc"],
                 ((0, 0), (0, 64 - params["wc"].shape[1]))).astype(jnp.bfloat16)
    bc = jnp.pad(params["bc"],
                 ((0, 0), (0, 64 - params["bc"].shape[1]))).astype(jnp.float32)

    weights = (w1, t1, w2, t2, w3, t3, wf, tf, wc, bc)

    def const_spec(a):
        return pl.BlockSpec(a.shape, lambda i: (0,) * a.ndim)

    in_specs = [pl.BlockSpec((tile_rows, Cin), lambda i: (i, 0))]
    in_specs += [const_spec(a) for a in weights]
    out_specs = pl.BlockSpec((tile_b, 128), lambda i: (i, 0))

    rows_total = btot_pad * L
    flops = (2 * rows_total * (kss[0] * Cin * C1 + kss[1] * C1 * C2
                               + kss[2] * C2 * C3)
             + 2 * btot_pad * (C3 * 64 + 64 * 64))
    bytes_accessed = (int(x.size) * 4 + btot_pad * 128 * 4
                      + sum(int(a.size) * a.dtype.itemsize for a in weights))

    out = pl.pallas_call(
        functools.partial(fcn_kernel, L=L, kss=tuple(kss), pads=tuple(pads)),
        grid=(n_tiles,),
        in_specs=in_specs,
        out_specs=out_specs,
        out_shape=jax.ShapeDtypeStruct((btot_pad, 128), jnp.float32),
        compiler_params=pltpu.CompilerParams(
            dimension_semantics=("parallel",),          # v7x: shard tiles on 2 TCs
            vmem_limit_bytes=40 * 1024 * 1024),         # fits v7x 64 MiB physical
        cost_estimate=pl.CostEstimate(flops=flops, transcendentals=0,
                                      bytes_accessed=bytes_accessed),
    )(x, *weights)

    s_f = out[:B, :64]                    # signal_feature(convs(signal))
    r_f = out[B:btot, :64]                # signal_feature(convs(random_s))
    logits = out[:B, 64:65]               # classifier(s_f)
    return logits, s_f, r_f


# ----------------------------- pure-JAX reference ----------------------------


def fcn_reference(signal_ncl, random_ncl, params, kss, pads):
    """f32 eval-mode reference (Dropout = identity) for correctness checks."""
    def conv_bn_relu(x_nlc, w, b, s, t, pad):
        y = jax.lax.conv_general_dilated(
            x_nlc, w, window_strides=(1,), padding=[(pad, pad)],
            dimension_numbers=("NWC", "WIO", "NWC"))
        return jnp.maximum((y + b) * s + t, 0.0)

    def trunk(x_ncl):
        h = jnp.transpose(x_ncl.astype(jnp.float32), (0, 2, 1))
        h = conv_bn_relu(h, params["w1"], params["b1"], params["s1"],
                         params["t1"], pads[0])
        h = conv_bn_relu(h, params["w2"], params["b2"], params["s2"],
                         params["t2"], pads[1])
        h = conv_bn_relu(h, params["w3"], params["b3"], params["s3"],
                         params["t3"], pads[2])
        pooled = jnp.max(h, axis=1)                        # (N, C3)
        f = pooled @ params["wf"]
        return jnp.maximum((f + params["bf"]) * params["sf"] + params["tf"], 0.0)

    s_f = trunk(signal_ncl)
    r_f = trunk(random_ncl)
    logits = s_f @ params["wc"] + params["bc"]
    return logits, s_f, r_f


# ------------------------------- params -------------------------------------


def init_params(key, cin, chans, kss):
    C1, C2, C3 = chans
    ks1, ks2, ks3 = kss
    keys = iter(jax.random.split(key, 32))

    def conv(ci, co, ks):
        w = 0.1 * jax.random.normal(next(keys), (ks, ci, co), jnp.float32)
        b = 0.05 * jax.random.normal(next(keys), (1, co), jnp.float32)
        return w, b

    def bn(c):
        gamma = 1.0 + 0.1 * jax.random.normal(next(keys), (1, c), jnp.float32)
        beta = 0.05 * jax.random.normal(next(keys), (1, c), jnp.float32)
        mean = 0.1 * jax.random.normal(next(keys), (1, c), jnp.float32)
        var = 1.0 + 0.1 * jnp.abs(
            jax.random.normal(next(keys), (1, c), jnp.float32))
        scale = gamma / jnp.sqrt(var + EPS)
        shift = beta - mean * scale
        return scale, shift

    w1, b1 = conv(cin, C1, ks1); s1, t1 = bn(C1)
    w2, b2 = conv(C1, C2, ks2);  s2, t2 = bn(C2)
    w3, b3 = conv(C2, C3, ks3);  s3, t3 = bn(C3)
    wf = 0.1 * jax.random.normal(next(keys), (C3, 64), jnp.float32)
    bf = 0.05 * jax.random.normal(next(keys), (1, 64), jnp.float32)
    sf, tf = bn(64)
    wc = 0.1 * jax.random.normal(next(keys), (64, 1), jnp.float32)
    bc = 0.05 * jax.random.normal(next(keys), (1, 1), jnp.float32)
    return dict(w1=w1, b1=b1, s1=s1, t1=t1,
                w2=w2, b2=b2, s2=s2, t2=t2,
                w3=w3, b3=b3, s3=s3, t3=t3,
                wf=wf, bf=bf, sf=sf, tf=tf,
                wc=wc, bc=bc)


# --------------------------------- main --------------------------------------


if __name__ == "__main__":
    # Small shapes consistent with the module: chan_3 must be 128 because
    # signal_feature is Linear(128, 64) and classifier is Linear(64, 1).
    B, Cin, L = 2, 4, 16
    C1, C2, C3 = 8, 16, 128
    kss = (7, 5, 3)
    pads = tuple((k - 1) // 2 for k in kss)

    key = jax.random.PRNGKey(0)
    k_sig, k_rnd, k_par = jax.random.split(key, 3)
    signal = jax.random.normal(k_sig, (B, Cin, L), jnp.float32)    # NCL
    random_s = jax.random.normal(k_rnd, (B, Cin, L), jnp.float32)  # NCL
    params = init_params(k_par, Cin, (C1, C2, C3), kss)

    fwd = jax.jit(functools.partial(fcn_forward, kss=kss, pads=pads))
    logits, s_f, r_f = fwd(signal, random_s, params)
    jax.block_until_ready((logits, s_f, r_f))

    assert logits.shape == (B, 1)
    assert s_f.shape == (B, 64)
    assert r_f.shape == (B, 64)

    # Pure-JAX f32 reference; loose tolerance covers the bf16 MXU matmuls.
    l_ref, s_ref, r_ref = fcn_reference(signal, random_s, params, kss, pads)
    for got, want in ((logits, l_ref), (s_f, s_ref), (r_f, r_ref)):
        err = float(jnp.max(jnp.abs(got - want)))
        assert err < 5e-2, f"mismatch vs reference: max abs err {err}"

    print("KERNEL_OK")
</pallas_src>

<mosaic_0001>
module attributes {stable_mosaic.version = 11 : i64} {
  func.func @fcn_kernel(%arg0: i32, %arg1: memref<128x4xf32, #tpu.memory_space<vmem>>, %arg2: memref<28x8xbf16, #tpu.memory_space<vmem>>, %arg3: memref<1x8xf32, #tpu.memory_space<vmem>>, %arg4: memref<40x16xbf16, #tpu.memory_space<vmem>>, %arg5: memref<1x16xf32, #tpu.memory_space<vmem>>, %arg6: memref<48x128xbf16, #tpu.memory_space<vmem>>, %arg7: memref<1x128xf32, #tpu.memory_space<vmem>>, %arg8: memref<128x64xbf16, #tpu.memory_space<vmem>>, %arg9: memref<1x64xf32, #tpu.memory_space<vmem>>, %arg10: memref<64x64xbf16, #tpu.memory_space<vmem>>, %arg11: memref<1x64xf32, #tpu.memory_space<vmem>>, %arg12: memref<8x128xf32, #tpu.memory_space<vmem>>) attributes {dimension_semantics = [#tpu.dimension_semantics<parallel>], iteration_bounds = array<i64: 1>, scalar_prefetch = 0 : i64, scratch_operands = 0 : i64, tpu.core_type = #tpu.core_type<tc>, window_params = [{transform_indices = @transform_0, window_bounds = array<i64: 128, 4>}, {pipeline_mode = #tpu.pipeline_mode<synchronous>, transform_indices = @transform_1, window_bounds = array<i64: 28, 8>}, {pipeline_mode = #tpu.pipeline_mode<synchronous>, transform_indices = @transform_2, window_bounds = array<i64: 1, 8>}, {pipeline_mode = #tpu.pipeline_mode<synchronous>, transform_indices = @transform_3, window_bounds = array<i64: 40, 16>}, {pipeline_mode = #tpu.pipeline_mode<synchronous>, transform_indices = @transform_4, window_bounds = array<i64: 1, 16>}, {pipeline_mode = #tpu.pipeline_mode<synchronous>, transform_indices = @transform_5, window_bounds = array<i64: 48, 128>}, {pipeline_mode = #tpu.pipeline_mode<synchronous>, transform_indices = @transform_6, window_bounds = array<i64: 1, 128>}, {pipeline_mode = #tpu.pipeline_mode<synchronous>, transform_indices = @transform_7, window_bounds = array<i64: 128, 64>}, {pipeline_mode = #tpu.pipeline_mode<synchronous>, transform_indices = @transform_8, window_bounds = array<i64: 1, 64>}, {pipeline_mode = #tpu.pipeline_mode<synchronous>, transform_indices = @transform_9, window_bounds = array<i64: 64, 64>}, {pipeline_mode = #tpu.pipeline_mode<synchronous>, transform_indices = @transform_10, window_bounds = array<i64: 1, 64>}, {transform_indices = @transform_11, window_bounds = array<i64: 8, 128>}]} {
    %0 = tpu.iota {dimensions = array<i32: 0>} : vector<128x1xi32>
    %c16_i32 = arith.constant 16 : i32
    %c0_i32 = arith.constant 0 : i32
    %1 = arith.cmpi eq, %c16_i32, %c0_i32 : i32
    %c1_i32 = arith.constant 1 : i32
    %2 = arith.select %1, %c1_i32, %c16_i32 : i32
    %3 = vector.broadcast %2 : i32 to vector<128x1xi32>
    %4 = arith.remsi %0, %3 : vector<128x1xi32>
    %c0_i32_0 = arith.constant 0 : i32
    %5 = vector.broadcast %c0_i32_0 : i32 to vector<128x1xi32>
    %6 = arith.cmpi ne, %4, %5 : vector<128x1xi32>
    %c0_i32_1 = arith.constant 0 : i32
    %7 = vector.broadcast %c0_i32_1 : i32 to vector<128x1xi32>
    %8 = arith.cmpi slt, %4, %7 : vector<128x1xi32>
    %c0_i32_2 = arith.constant 0 : i32
    %9 = arith.cmpi slt, %2, %c0_i32_2 : i32
    %10 = vector.broadcast %9 : i1 to vector<128x1xi1>
    %11 = vector.broadcast %10 : vector<128x1xi1> to vector<128x1xi1>
    %12 = arith.xori %8, %11 : vector<128x1xi1>
    %13 = arith.andi %12, %6 : vector<128x1xi1>
    %14 = vector.broadcast %2 : i32 to vector<128x1xi32>
    %15 = arith.addi %4, %14 : vector<128x1xi32>
    %16 = arith.select %13, %15, %4 : vector<128x1xi1>, vector<128x1xi32>
    %c0 = arith.constant 0 : index
    %c0_3 = arith.constant 0 : index
    %17 = vector.load %arg1[%c0, %c0_3] : memref<128x4xf32, #tpu.memory_space<vmem>>, vector<128x4xf32>
    %c3_i32 = arith.constant 3 : i32
    %18 = tpu.dynamic_rotate %17 by %c3_i32 dim 0 : vector<128x4xf32>, i32 -> vector<128x4xf32>
    %c3_i32_4 = arith.constant 3 : i32
    %19 = vector.broadcast %c3_i32_4 : i32 to vector<128x1xi32>
    %20 = arith.cmpi sge, %16, %19 : vector<128x1xi32>
    %c19_i32 = arith.constant 19 : i32
    %21 = vector.broadcast %c19_i32 : i32 to vector<128x1xi32>
    %22 = arith.cmpi slt, %16, %21 : vector<128x1xi32>
    %23 = arith.andi %20, %22 : vector<128x1xi1>
    %cst = arith.constant 0.000000e+00 : f32
    %24 = vector.shape_cast %23 : vector<128x1xi1> to vector<128x1xi1>
    %25 = vector.broadcast %24 : vector<128x1xi1> to vector<128x4xi1>
    %26 = vector.broadcast %cst : f32 to vector<128x4xf32>
    %27 = arith.select %25, %18, %26 : vector<128x4xi1>, vector<128x4xf32>
    %c2_i32 = arith.constant 2 : i32
    %28 = tpu.dynamic_rotate %17 by %c2_i32 dim 0 : vector<128x4xf32>, i32 -> vector<128x4xf32>
    %c2_i32_5 = arith.constant 2 : i32
    %29 = vector.broadcast %c2_i32_5 : i32 to vector<128x1xi32>
    %30 = arith.cmpi sge, %16, %29 : vector<128x1xi32>
    %c18_i32 = arith.constant 18 : i32
    %31 = vector.broadcast %c18_i32 : i32 to vector<128x1xi32>
    %32 = arith.cmpi slt, %16, %31 : vector<128x1xi32>
    %33 = arith.andi %30, %32 : vector<128x1xi1>
    %cst_6 = arith.constant 0.000000e+00 : f32
    %34 = vector.shape_cast %33 : vector<128x1xi1> to vector<128x1xi1>
    %35 = vector.broadcast %34 : vector<128x1xi1> to vector<128x4xi1>
    %36 = vector.broadcast %cst_6 : f32 to vector<128x4xf32>
    %37 = arith.select %35, %28, %36 : vector<128x4xi1>, vector<128x4xf32>
    %c1_i32_7 = arith.constant 1 : i32
    %38 = tpu.dynamic_rotate %17 by %c1_i32_7 dim 0 : vector<128x4xf32>, i32 -> vector<128x4xf32>
    %c1_i32_8 = arith.constant 1 : i32
    %39 = vector.broadcast %c1_i32_8 : i32 to vector<128x1xi32>
    %40 = arith.cmpi sge, %16, %39 : vector<128x1xi32>
    %c17_i32 = arith.constant 17 : i32
    %41 = vector.broadcast %c17_i32 : i32 to vector<128x1xi32>
    %42 = arith.cmpi slt, %16, %41 : vector<128x1xi32>
    %43 = arith.andi %40, %42 : vector<128x1xi1>
    %cst_9 = arith.constant 0.000000e+00 : f32
    %44 = vector.shape_cast %43 : vector<128x1xi1> to vector<128x1xi1>
    %45 = vector.broadcast %44 : vector<128x1xi1> to vector<128x4xi1>
    %46 = vector.broadcast %cst_9 : f32 to vector<128x4xf32>
    %47 = arith.select %45, %38, %46 : vector<128x4xi1>, vector<128x4xf32>
    %c127_i32 = arith.constant 127 : i32
    %48 = tpu.dynamic_rotate %17 by %c127_i32 dim 0 : vector<128x4xf32>, i32 -> vector<128x4xf32>
    %c-1_i32 = arith.constant -1 : i32
    %49 = vector.broadcast %c-1_i32 : i32 to vector<128x1xi32>
    %50 = arith.cmpi sge, %16, %49 : vector<128x1xi32>
    %c15_i32 = arith.constant 15 : i32
    %51 = vector.broadcast %c15_i32 : i32 to vector<128x1xi32>
    %52 = arith.cmpi slt, %16, %51 : vector<128x1xi32>
    %53 = arith.andi %50, %52 : vector<128x1xi1>
    %cst_10 = arith.constant 0.000000e+00 : f32
    %54 = vector.shape_cast %53 : vector<128x1xi1> to vector<128x1xi1>
    %55 = vector.broadcast %54 : vector<128x1xi1> to vector<128x4xi1>
    %56 = vector.broadcast %cst_10 : f32 to vector<128x4xf32>
    %57 = arith.select %55, %48, %56 : vector<128x4xi1>, vector<128x4xf32>
    %c126_i32 = arith.constant 126 : i32
    %58 = tpu.dynamic_rotate %17 by %c126_i32 dim 0 : vector<128x4xf32>, i32 -> vector<128x4xf32>
    %c-2_i32 = arith.constant -2 : i32
    %59 = vector.broadcast %c-2_i32 : i32 to vector<128x1xi32>
    %60 = arith.cmpi sge, %16, %59 : vector<128x1xi32>
    %c14_i32 = arith.constant 14 : i32
    %61 = vector.broadcast %c14_i32 : i32 to vector<128x1xi32>
    %62 = arith.cmpi slt, %16, %61 : vector<128x1xi32>
    %63 = arith.andi %60, %62 : vector<128x1xi1>
    %cst_11 = arith.constant 0.000000e+00 : f32
    %64 = vector.shape_cast %63 : vector<128x1xi1> to vector<128x1xi1>
    %65 = vector.broadcast %64 : vector<128x1xi1> to vector<128x4xi1>
    %66 = vector.broadcast %cst_11 : f32 to vector<128x4xf32>
    %67 = arith.select %65, %58, %66 : vector<128x4xi1>, vector<128x4xf32>
    %c125_i32 = arith.constant 125 : i32
    %68 = tpu.dynamic_rotate %17 by %c125_i32 dim 0 : vector<128x4xf32>, i32 -> vector<128x4xf32>
    %c-3_i32 = arith.constant -3 : i32
    %69 = vector.broadcast %c-3_i32 : i32 to vector<128x1xi32>
    %70 = arith.cmpi sge, %16, %69 : vector<128x1xi32>
    %c13_i32 = arith.constant 13 : i32
    %71 = vector.broadcast %c13_i32 : i32 to vector<128x1xi32>
    %72 = arith.cmpi slt, %16, %71 : vector<128x1xi32>
    %73 = arith.andi %70, %72 : vector<128x1xi1>
    %cst_12 = arith.constant 0.000000e+00 : f32
    %74 = vector.shape_cast %73 : vector<128x1xi1> to vector<128x1xi1>
    %75 = vector.broadcast %74 : vector<128x1xi1> to vector<128x4xi1>
    %76 = vector.broadcast %cst_12 : f32 to vector<128x4xf32>
    %77 = arith.select %75, %68, %76 : vector<128x4xi1>, vector<128x4xf32>
    %78 = tpu.concatenate %27, %37, %47, %17, %57, %67, %77 in 1 : vector<128x4xf32>, vector<128x4xf32>, vector<128x4xf32>, vector<128x4xf32>, vector<128x4xf32>, vector<128x4xf32>, vector<128x4xf32> -> vector<128x28xf32>
    %79 = arith.truncf %78 : vector<128x28xf32> to vector<128x28xbf16>
    %c0_13 = arith.constant 0 : index
    %c0_14 = arith.constant 0 : index
    %80 = vector.load %arg2[%c0_13, %c0_14] : memref<28x8xbf16, #tpu.memory_space<vmem>>, vector<28x8xbf16>
    %cst_15 = arith.constant dense<0.000000e+00> : vector<128x8xf32>
    %81 = tpu.matmul %79, %80, %cst_15 {dimension_numbers = #tpu.dot_dimension_numbers<[1], [0], [0], [1], [0, 0, 1, 1], [], []>} : vector<128x28xbf16>, vector<28x8xbf16>, vector<128x8xf32> -> vector<128x8xf32>
    %c0_16 = arith.constant 0 : index
    %c0_17 = arith.constant 0 : index
    %82 = vector.load %arg3[%c0_16, %c0_17] : memref<1x8xf32, #tpu.memory_space<vmem>>, vector<1x8xf32>
    %83 = vector.broadcast %82 : vector<1x8xf32> to vector<128x8xf32>
    %84 = arith.addf %81, %83 : vector<128x8xf32>
    %cst_18 = arith.constant 0.000000e+00 : f32
    %85 = vector.broadcast %cst_18 : f32 to vector<128x8xf32>
    %86 = arith.maximumf %84, %85 : vector<128x8xf32>
    %c2_i32_19 = arith.constant 2 : i32
    %87 = tpu.dynamic_rotate %86 by %c2_i32_19 dim 0 : vector<128x8xf32>, i32 -> vector<128x8xf32>
    %c2_i32_20 = arith.constant 2 : i32
    %88 = vector.broadcast %c2_i32_20 : i32 to vector<128x1xi32>
    %89 = arith.cmpi sge, %16, %88 : vector<128x1xi32>
    %c18_i32_21 = arith.constant 18 : i32
    %90 = vector.broadcast %c18_i32_21 : i32 to vector<128x1xi32>
    %91 = arith.cmpi slt, %16, %90 : vector<128x1xi32>
    %92 = arith.andi %89, %91 : vector<128x1xi1>
    %cst_22 = arith.constant 0.000000e+00 : f32
    %93 = vector.shape_cast %92 : vector<128x1xi1> to vector<128x1xi1>
    %94 = vector.broadcast %93 : vector<128x1xi1> to vector<128x8xi1>
    %95 = vector.broadcast %cst_22 : f32 to vector<128x8xf32>
    %96 = arith.select %94, %87, %95 : vector<128x8xi1>, vector<128x8xf32>
    %c1_i32_23 = arith.constant 1 : i32
    %97 = tpu.dynamic_rotate %86 by %c1_i32_23 dim 0 : vector<128x8xf32>, i32 -> vector<128x8xf32>
    %c1_i32_24 = arith.constant 1 : i32
    %98 = vector.broadcast %c1_i32_24 : i32 to vector<128x1xi32>
    %99 = arith.cmpi sge, %16, %98 : vector<128x1xi32>
    %c17_i32_25 = arith.constant 17 : i32
    %100 = vector.broadcast %c17_i32_25 : i32 to vector<128x1xi32>
    %101 = arith.cmpi slt, %16, %100 : vector<128x1xi32>
    %102 = arith.andi %99, %101 : vector<128x1xi1>
    %cst_26 = arith.constant 0.000000e+00 : f32
    %103 = vector.shape_cast %102 : vector<128x1xi1> to vector<128x1xi1>
    %104 = vector.broadcast %103 : vector<128x1xi1> to vector<128x8xi1>
    %105 = vector.broadcast %cst_26 : f32 to vector<128x8xf32>
    %106 = arith.select %104, %97, %105 : vector<128x8xi1>, vector<128x8xf32>
    %c127_i32_27 = arith.constant 127 : i32
    %107 = tpu.dynamic_rotate %86 by %c127_i32_27 dim 0 : vector<128x8xf32>, i32 -> vector<128x8xf32>
    %c-1_i32_28 = arith.constant -1 : i32
    %108 = vector.broadcast %c-1_i32_28 : i32 to vector<128x1xi32>
    %109 = arith.cmpi sge, %16, %108 : vector<128x1xi32>
    %c15_i32_29 = arith.constant 15 : i32
    %110 = vector.broadcast %c15_i32_29 : i32 to vector<128x1xi32>
    %111 = arith.cmpi slt, %16, %110 : vector<128x1xi32>
    %112 = arith.andi %109, %111 : vector<128x1xi1>
    %cst_30 = arith.constant 0.000000e+00 : f32
    %113 = vector.shape_cast %112 : vector<128x1xi1> to vector<128x1xi1>
    %114 = vector.broadcast %113 : vector<128x1xi1> to vector<128x8xi1>
    %115 = vector.broadcast %cst_30 : f32 to vector<128x8xf32>
    %116 = arith.select %114, %107, %115 : vector<128x8xi1>, vector<128x8xf32>
    %c126_i32_31 = arith.constant 126 : i32
    %117 = tpu.dynamic_rotate %86 by %c126_i32_31 dim 0 : vector<128x8xf32>, i32 -> vector<128x8xf32>
    %c-2_i32_32 = arith.constant -2 : i32
    %118 = vector.broadcast %c-2_i32_32 : i32 to vector<128x1xi32>
    %119 = arith.cmpi sge, %16, %118 : vector<128x1xi32>
    %c14_i32_33 = arith.constant 14 : i32
    %120 = vector.broadcast %c14_i32_33 : i32 to vector<128x1xi32>
    %121 = arith.cmpi slt, %16, %120 : vector<128x1xi32>
    %122 = arith.andi %119, %121 : vector<128x1xi1>
    %cst_34 = arith.constant 0.000000e+00 : f32
    %123 = vector.shape_cast %122 : vector<128x1xi1> to vector<128x1xi1>
    %124 = vector.broadcast %123 : vector<128x1xi1> to vector<128x8xi1>
    %125 = vector.broadcast %cst_34 : f32 to vector<128x8xf32>
    %126 = arith.select %124, %117, %125 : vector<128x8xi1>, vector<128x8xf32>
    %127 = tpu.concatenate %96, %106, %86, %116, %126 in 1 : vector<128x8xf32>, vector<128x8xf32>, vector<128x8xf32>, vector<128x8xf32>, vector<128x8xf32> -> vector<128x40xf32>
    %128 = arith.truncf %127 : vector<128x40xf32> to vector<128x40xbf16>
    %c0_35 = arith.constant 0 : index
    %c0_36 = arith.constant 0 : index
    %129 = vector.load %arg4[%c0_35, %c0_36] : memref<40x16xbf16, #tpu.memory_space<vmem>>, vector<40x16xbf16>
    %cst_37 = arith.constant dense<0.000000e+00> : vector<128x16xf32>
    %130 = tpu.matmul %128, %129, %cst_37 {dimension_numbers = #tpu.dot_dimension_numbers<[1], [0], [0], [1], [0, 0, 1, 1], [], []>} : vector<128x40xbf16>, vector<40x16xbf16>, vector<128x16xf32> -> vector<128x16xf32>
    %c0_38 = arith.constant 0 : index
    %c0_39 = arith.constant 0 : index
    %131 = vector.load %arg5[%c0_38, %c0_39] : memref<1x16xf32, #tpu.memory_space<vmem>>, vector<1x16xf32>
    %132 = vector.broadcast %131 : vector<1x16xf32> to vector<128x16xf32>
    %133 = arith.addf %130, %132 : vector<128x16xf32>
    %cst_40 = arith.constant 0.000000e+00 : f32
    %134 = vector.broadcast %cst_40 : f32 to vector<128x16xf32>
    %135 = arith.maximumf %133, %134 : vector<128x16xf32>
    %c1_i32_41 = arith.constant 1 : i32
    %136 = tpu.dynamic_rotate %135 by %c1_i32_41 dim 0 : vector<128x16xf32>, i32 -> vector<128x16xf32>
    %c1_i32_42 = arith.constant 1 : i32
    %137 = vector.broadcast %c1_i32_42 : i32 to vector<128x1xi32>
    %138 = arith.cmpi sge, %16, %137 : vector<128x1xi32>
    %c17_i32_43 = arith.constant 17 : i32
    %139 = vector.broadcast %c17_i32_43 : i32 to vector<128x1xi32>
    %140 = arith.cmpi slt, %16, %139 : vector<128x1xi32>
    %141 = arith.andi %138, %140 : vector<128x1xi1>
    %cst_44 = arith.constant 0.000000e+00 : f32
    %142 = vector.shape_cast %141 : vector<128x1xi1> to vector<128x1xi1>
    %143 = vector.broadcast %142 : vector<128x1xi1> to vector<128x16xi1>
    %144 = vector.broadcast %cst_44 : f32 to vector<128x16xf32>
    %145 = arith.select %143, %136, %144 : vector<128x16xi1>, vector<128x16xf32>
    %c127_i32_45 = arith.constant 127 : i32
    %146 = tpu.dynamic_rotate %135 by %c127_i32_45 dim 0 : vector<128x16xf32>, i32 -> vector<128x16xf32>
    %c-1_i32_46 = arith.constant -1 : i32
    %147 = vector.broadcast %c-1_i32_46 : i32 to vector<128x1xi32>
    %148 = arith.cmpi sge, %16, %147 : vector<128x1xi32>
    %c15_i32_47 = arith.constant 15 : i32
    %149 = vector.broadcast %c15_i32_47 : i32 to vector<128x1xi32>
    %150 = arith.cmpi slt, %16, %149 : vector<128x1xi32>
    %151 = arith.andi %148, %150 : vector<128x1xi1>
    %cst_48 = arith.constant 0.000000e+00 : f32
    %152 = vector.shape_cast %151 : vector<128x1xi1> to vector<128x1xi1>
    %153 = vector.broadcast %152 : vector<128x1xi1> to vector<128x16xi1>
    %154 = vector.broadcast %cst_48 : f32 to vector<128x16xf32>
    %155 = arith.select %153, %146, %154 : vector<128x16xi1>, vector<128x16xf32>
    %156 = tpu.concatenate %145, %135, %155 in 1 : vector<128x16xf32>, vector<128x16xf32>, vector<128x16xf32> -> vector<128x48xf32>
    %157 = arith.truncf %156 : vector<128x48xf32> to vector<128x48xbf16>
    %c0_49 = arith.constant 0 : index
    %c0_50 = arith.constant 0 : index
    %158 = vector.load %arg6[%c0_49, %c0_50] : memref<48x128xbf16, #tpu.memory_space<vmem>>, vector<48x128xbf16>
    %cst_51 = arith.constant dense<0.000000e+00> : vector<128x128xf32>
    %159 = tpu.matmul %157, %158, %cst_51 {dimension_numbers = #tpu.dot_dimension_numbers<[1], [0], [0], [1], [0, 0, 1, 1], [], []>} : vector<128x48xbf16>, vector<48x128xbf16>, vector<128x128xf32> -> vector<128x128xf32>
    %c0_52 = arith.constant 0 : index
    %c0_53 = arith.constant 0 : index
    %160 = vector.load %arg7[%c0_52, %c0_53] : memref<1x128xf32, #tpu.memory_space<vmem>>, vector<1x128xf32>
    %161 = vector.broadcast %160 : vector<1x128xf32> to vector<128x128xf32>
    %162 = arith.addf %159, %161 : vector<128x128xf32>
    %cst_54 = arith.constant 0.000000e+00 : f32
    %163 = vector.broadcast %cst_54 : f32 to vector<128x128xf32>
    %164 = arith.maximumf %162, %163 : vector<128x128xf32>
    %165 = vector.shape_cast %164 : vector<128x128xf32> to vector<8x16x128xf32>
    %cst_55 = arith.constant dense<0xFF800000> : vector<8x128xf32>
    %166 = vector.multi_reduction <maximumf>, %165, %cst_55 [1] : vector<8x16x128xf32> to vector<8x128xf32>
    %167 = arith.truncf %166 : vector<8x128xf32> to vector<8x128xbf16>
    %c0_56 = arith.constant 0 : index
    %c0_57 = arith.constant 0 : index
    %168 = vector.load %arg8[%c0_56, %c0_57] : memref<128x64xbf16, #tpu.memory_space<vmem>>, vector<128x64xbf16>
    %cst_58 = arith.constant dense<0.000000e+00> : vector<8x64xf32>
    %169 = tpu.matmul %167, %168, %cst_58 {dimension_numbers = #tpu.dot_dimension_numbers<[1], [0], [0], [1], [0, 0, 1, 1], [], []>} : vector<8x128xbf16>, vector<128x64xbf16>, vector<8x64xf32> -> vector<8x64xf32>
    %c0_59 = arith.constant 0 : index
    %c0_60 = arith.constant 0 : index
    %170 = vector.load %arg9[%c0_59, %c0_60] : memref<1x64xf32, #tpu.memory_space<vmem>>, vector<1x64xf32>
    %171 = vector.broadcast %170 : vector<1x64xf32> to vector<8x64xf32>
    %172 = arith.addf %169, %171 : vector<8x64xf32>
    %cst_61 = arith.constant 0.000000e+00 : f32
    %173 = vector.broadcast %cst_61 : f32 to vector<8x64xf32>
    %174 = arith.maximumf %172, %173 : vector<8x64xf32>
    %175 = arith.truncf %174 : vector<8x64xf32> to vector<8x64xbf16>
    %c0_62 = arith.constant 0 : index
    %c0_63 = arith.constant 0 : index
    %176 = vector.load %arg10[%c0_62, %c0_63] : memref<64x64xbf16, #tpu.memory_space<vmem>>, vector<64x64xbf16>
    %cst_64 = arith.constant dense<0.000000e+00> : vector<8x64xf32>
    %177 = tpu.matmul %175, %176, %cst_64 {dimension_numbers = #tpu.dot_dimension_numbers<[1], [0], [0], [1], [0, 0, 1, 1], [], []>} : vector<8x64xbf16>, vector<64x64xbf16>, vector<8x64xf32> -> vector<8x64xf32>
    %c0_65 = arith.constant 0 : index
    %c0_66 = arith.constant 0 : index
    %178 = vector.load %arg11[%c0_65, %c0_66] : memref<1x64xf32, #tpu.memory_space<vmem>>, vector<1x64xf32>
    %179 = vector.broadcast %178 : vector<1x64xf32> to vector<8x64xf32>
    %180 = arith.addf %177, %179 : vector<8x64xf32>
    %c0_67 = arith.constant 0 : index
    %c0_68 = arith.constant 0 : index
    %181 = vector.load %arg12[%c0_67, %c0_68] : memref<8x128xf32, #tpu.memory_space<vmem>>, vector<8x64xf32>
    tpu.vector_store %arg12[%c0_67, %c0_68], %174 {strides = array<i32>} : memref<8x128xf32, #tpu.memory_space<vmem>>, vector<8x64xf32>,
    %c0_69 = arith.constant 0 : index
    %c64 = arith.constant 64 : index
    %182 = vector.load %arg12[%c0_69, %c64] : memref<8x128xf32, #tpu.memory_space<vmem>>, vector<8x64xf32>
    tpu.vector_store %arg12[%c0_69, %c64], %180 {strides = array<i32>} : memref<8x128xf32, #tpu.memory_space<vmem>>, vector<8x64xf32>,
    return
  }
  func.func @transform_0(%arg0: i32) -> (i32, i32) {
    %c0_i32 = arith.constant 0 : i32
    %c0_i32_0 = arith.constant 0 : i32
    return %arg0, %c0_i32 : i32, i32
  }
  func.func @transform_1(%arg0: i32) -> (i32, i32) {
    %c0_i32 = arith.constant 0 : i32
    %c0_i32_0 = arith.constant 0 : i32
    %c0_i32_1 = arith.constant 0 : i32
    return %c0_i32, %c0_i32_0 : i32, i32
  }
  func.func @transform_2(%arg0: i32) -> (i32, i32) {
    %c0_i32 = arith.constant 0 : i32
    %c0_i32_0 = arith.constant 0 : i32
    %c0_i32_1 = arith.constant 0 : i32
    return %c0_i32, %c0_i32_0 : i32, i32
  }
  func.func @transform_3(%arg0: i32) -> (i32, i32) {
    %c0_i32 = arith.constant 0 : i32
    %c0_i32_0 = arith.constant 0 : i32
    %c0_i32_1 = arith.constant 0 : i32
    return %c0_i32, %c0_i32_0 : i32, i32
  }
  func.func @transform_4(%arg0: i32) -> (i32, i32) {
    %c0_i32 = arith.constant 0 : i32
    %c0_i32_0 = arith.constant 0 : i32
    %c0_i32_1 = arith.constant 0 : i32
    return %c0_i32, %c0_i32_0 : i32, i32
  }
  func.func @transform_5(%arg0: i32) -> (i32, i32) {
    %c0_i32 = arith.constant 0 : i32
    %c0_i32_0 = arith.constant 0 : i32
    %c0_i32_1 = arith.constant 0 : i32
    return %c0_i32, %c0_i32_0 : i32, i32
  }
  func.func @transform_6(%arg0: i32) -> (i32, i32) {
    %c0_i32 = arith.constant 0 : i32
    %c0_i32_0 = arith.constant 0 : i32
    %c0_i32_1 = arith.constant 0 : i32
    return %c0_i32, %c0_i32_0 : i32, i32
  }
  func.func @transform_7(%arg0: i32) -> (i32, i32) {
    %c0_i32 = arith.constant 0 : i32
    %c0_i32_0 = arith.constant 0 : i32
    %c0_i32_1 = arith.constant 0 : i32
    return %c0_i32, %c0_i32_0 : i32, i32
  }
  func.func @transform_8(%arg0: i32) -> (i32, i32) {
    %c0_i32 = arith.constant 0 : i32
    %c0_i32_0 = arith.constant 0 : i32
    %c0_i32_1 = arith.constant 0 : i32
    return %c0_i32, %c0_i32_0 : i32, i32
  }
  func.func @transform_9(%arg0: i32) -> (i32, i32) {
    %c0_i32 = arith.constant 0 : i32
    %c0_i32_0 = arith.constant 0 : i32
    %c0_i32_1 = arith.constant 0 : i32
    return %c0_i32, %c0_i32_0 : i32, i32
  }
  func.func @transform_10(%arg0: i32) -> (i32, i32) {
    %c0_i32 = arith.constant 0 : i32
    %c0_i32_0 = arith.constant 0 : i32
    %c0_i32_1 = arith.constant 0 : i32
    return %c0_i32, %c0_i32_0 : i32, i32
  }
  func.func @transform_11(%arg0: i32) -> (i32, i32) {
    %c0_i32 = arith.constant 0 : i32
    %c0_i32_0 = arith.constant 0 : i32
    return %arg0, %c0_i32 : i32, i32
  }
}

</mosaic_0001>

<llo_original>
// kernel: fcn_forward.1
$region0: #{fcn_forward.1}
  #allocation0 [shape = 'u32[]', space=smem, size = 0x4, offset = 0x4, fixed_abs, tag = 'smem constant byte address 0x4 - core index']
  #allocation1 [shape = 'u32[72,128]{1,0:T(1,128)}', space=vmem, size = 0x9000, scoped, tag = 'internal scratch']
  %s0 = inlined_call_operand.vmem [shape: f32[128,4], index: 0, kind: input, shape index: {}]
  %s1 = inlined_call_operand.vmem [shape: bf16[28,8], index: 1, kind: input, shape index: {}]
  %s2 = inlined_call_operand.vmem [shape: f32[1,8], index: 2, kind: input, shape index: {}]
  %s3 = inlined_call_operand.vmem [shape: bf16[40,16], index: 3, kind: input, shape index: {}]
  %s4 = inlined_call_operand.vmem [shape: f32[1,16], index: 4, kind: input, shape index: {}]
  %s5 = inlined_call_operand.vmem [shape: bf16[48,128], index: 5, kind: input, shape index: {}]
  %s6 = inlined_call_operand.vmem [shape: f32[1,128], index: 6, kind: input, shape index: {}]
  %s7 = inlined_call_operand.vmem [shape: bf16[128,64], index: 7, kind: input, shape index: {}]
  %s8 = inlined_call_operand.vmem [shape: f32[1,64], index: 8, kind: input, shape index: {}]
  %s9 = inlined_call_operand.vmem [shape: bf16[64,64], index: 9, kind: input, shape index: {}]
  %s10 = inlined_call_operand.vmem [shape: f32[1,64], index: 10, kind: input, shape index: {}]
  %s11 = inlined_call_operand.vmem [shape: f32[8,128], index: 11, kind: output, shape index: {}]
  %s12 = sld [smem:[#allocation0]]
  $region54: #{fcn_forward.1} parent=0
    _
  %s14 = ssub.s32 1, %s12
  %s15 = scalar_select 0, %s14, %s12
  // Predicated region
  $region2: #{fcn_forward.1} parent=0 // pred_check
    _
  $region3: #{fcn_forward.1} parent=0 // pred_check_branch
    %17 = sbr.rel (0) target = $region5
  $region4: #{fcn_forward.1} parent=0 // pred_region
    _
  $region5: #{fcn_forward.1} parent=0 // pred_fallthru
    _
  // Predicated region
  $region6: #{fcn_forward.1} parent=0 // pred_check
    _
  $region7: #{fcn_forward.1} parent=0 // pred_check_branch
    %19 = sbr.rel (0) target = $region9
  $region8: #{fcn_forward.1} parent=0 // pred_region
    _
  $region9: #{fcn_forward.1} parent=0 // pred_fallthru
    _
  // Predicated region
  $region10: #{fcn_forward.1} parent=0 // pred_check
    _
  $region11: #{fcn_forward.1} parent=0 // pred_check_branch
    %21 = sbr.rel (0) target = $region13
  $region12: #{fcn_forward.1} parent=0 // pred_region
    _
  $region13: #{fcn_forward.1} parent=0 // pred_fallthru
    _
  // Predicated region
  $region14: #{fcn_forward.1} parent=0 // pred_check
    _
  $region15: #{fcn_forward.1} parent=0 // pred_check_branch
    %23 = sbr.rel (0) target = $region17
  $region16: #{fcn_forward.1} parent=0 // pred_region
    _
  $region17: #{fcn_forward.1} parent=0 // pred_fallthru
    _
  // Predicated region
  $region18: #{fcn_forward.1} parent=0 // pred_check
    _
  $region19: #{fcn_forward.1} parent=0 // pred_check_branch
    %25 = sbr.rel (0) target = $region21
  $region20: #{fcn_forward.1} parent=0 // pred_region
    _
  $region21: #{fcn_forward.1} parent=0 // pred_fallthru
    _
  // Predicated region
  $region22: #{fcn_forward.1} parent=0 // pred_check
    _
  $region23: #{fcn_forward.1} parent=0 // pred_check_branch
    %27 = sbr.rel (0) target = $region25
  $region24: #{fcn_forward.1} parent=0 // pred_region
    _
  $region25: #{fcn_forward.1} parent=0 // pred_fallthru
    _
  // Predicated region
  $region26: #{fcn_forward.1} parent=0 // pred_check
    _
  $region27: #{fcn_forward.1} parent=0 // pred_check_branch
    %29 = sbr.rel (0) target = $region29
  $region28: #{fcn_forward.1} parent=0 // pred_region
    _
  $region29: #{fcn_forward.1} parent=0 // pred_fallthru
    _
  // Predicated region
  $region30: #{fcn_forward.1} parent=0 // pred_check
    _
  $region31: #{fcn_forward.1} parent=0 // pred_check_branch
    %31 = sbr.rel (0) target = $region33
  $region32: #{fcn_forward.1} parent=0 // pred_region
    _
  $region33: #{fcn_forward.1} parent=0 // pred_fallthru
    _
  // Predicated region
  $region34: #{fcn_forward.1} parent=0 // pred_check
    _
  $region35: #{fcn_forward.1} parent=0 // pred_check_branch
    %33 = sbr.rel (0) target = $region37
  $region36: #{fcn_forward.1} parent=0 // pred_region
    _
  $region37: #{fcn_forward.1} parent=0 // pred_fallthru
    _
  // Predicated region
  $region38: #{fcn_forward.1} parent=0 // pred_check
    _
  $region39: #{fcn_forward.1} parent=0 // pred_check_branch
    %35 = sbr.rel (0) target = $region41
  $region40: #{fcn_forward.1} parent=0 // pred_region
    _
  $region41: #{fcn_forward.1} parent=0 // pred_fallthru
    _
  // Predicated region
  $region42: #{fcn_forward.1} parent=0 // pred_check
    _
  $region43: #{fcn_forward.1} parent=0 // pred_check_branch
    %37 = sbr.rel (0) target = $region45
  $region44: #{fcn_forward.1} parent=0 // pred_region
    _
  $region45: #{fcn_forward.1} parent=0 // pred_fallthru
    _
  %v39 = vlaneseq
  %v40 = vshrl.u32 %v39, 7
  %v41 = vadd.s32 %v40, 8
  %v42 = vadd.s32 %v40, 16
  %v43 = vadd.s32 %v40, 24
  %v44 = vadd.s32 %v40, 32
  %v45 = vadd.s32 %v40, 40
  %v46 = vadd.s32 %v40, 48
  %v47 = vadd.s32 %v40, 56
  %v48 = vadd.s32 %v40, 64
  %v49 = vadd.s32 %v40, 72
  %v50 = vadd.s32 %v40, 80
  %v51 = vadd.s32 %v40, 88
  %v52 = vadd.s32 %v40, 96
  %v53 = vadd.s32 %v40, 104
  %v54 = vadd.s32 %v40, 112
  %v55 = vadd.s32 %v40, 120
  %vm56 = vcmp.lt.s32.totalorder %v40, 0
  %v57 = vsub.s32 0, %v40
  %v58 = vsel %vm56, %v57, %v40
  %v59 = vshrl.u32 %v58, 4
  %v60 = vand.u32 %v58, 15
  %v61 = vsub.s32 0, %v60
  %v62 = vsel %vm56, %v61, %v60
  %vm63 = vcmp.lt.s32.totalorder %v41, 0
  %v64 = vsub.s32 0, %v41
  %v65 = vsel %vm63, %v64, %v41
  %v66 = vshrl.u32 %v65, 4
  %v67 = vand.u32 %v65, 15
  %v68 = vsub.s32 0, %v67
  %v69 = vsel %vm63, %v68, %v67
  %vm70 = vcmp.lt.s32.totalorder %v42, 0
  %v71 = vsub.s32 0, %v42
  %v72 = vsel %vm70, %v71, %v42
  %v73 = vshrl.u32 %v72, 4
  %v74 = vand.u32 %v72, 15
  %v75 = vsub.s32 0, %v74
  %v76 = vsel %vm70, %v75, %v74
  %vm77 = vcmp.lt.s32.totalorder %v43, 0
  %v78 = vsub.s32 0, %v43
  %v79 = vsel %vm77, %v78, %v43
  %v80 = vshrl.u32 %v79, 4
  %v81 = vand.u32 %v79, 15
  %v82 = vsub.s32 0, %v81
  %v83 = vsel %vm77, %v82, %v81
  %vm84 = vcmp.lt.s32.totalorder %v44, 0
  %v85 = vsub.s32 0, %v44
  %v86 = vsel %vm84, %v85, %v44
  %v87 = vshrl.u32 %v86, 4
  %v88 = vand.u32 %v86, 15
  %v89 = vsub.s32 0, %v88
  %v90 = vsel %vm84, %v89, %v88
  %vm91 = vcmp.lt.s32.totalorder %v45, 0
  %v92 = vsub.s32 0, %v45
  %v93 = vsel %vm91, %v92, %v45
  %v94 = vshrl.u32 %v93, 4
  %v95 = vand.u32 %v93, 15
  %v96 = vsub.s32 0, %v95
  %v97 = vsel %vm91, %v96, %v95
  %vm98 = vcmp.lt.s32.totalorder %v46, 0
  %v99 = vsub.s32 0, %v46
  %v100 = vsel %vm98, %v99, %v46
  %v101 = vshrl.u32 %v100, 4
  %v102 = vand.u32 %v100, 15
  %v103 = vsub.s32 0, %v102
  %v104 = vsel %vm98, %v103, %v102
  %vm105 = vcmp.lt.s32.totalorder %v47, 0
  %v106 = vsub.s32 0, %v47
  %v107 = vsel %vm105, %v106, %v47
  %v108 = vshrl.u32 %v107, 4
  %v109 = vand.u32 %v107, 15
  %v110 = vsub.s32 0, %v109
  %v111 = vsel %vm105, %v110, %v109
  %vm112 = vcmp.lt.s32.totalorder %v48, 0
  %v113 = vsub.s32 0, %v48
  %v114 = vsel %vm112, %v113, %v48
  %v115 = vshrl.u32 %v114, 4
  %v116 = vand.u32 %v114, 15
  %v117 = vsub.s32 0, %v116
  %v118 = vsel %vm112, %v117, %v116
  %vm119 = vcmp.lt.s32.totalorder %v49, 0
  %v120 = vsub.s32 0, %v49
  %v121 = vsel %vm119, %v120, %v49
  %v122 = vshrl.u32 %v121, 4
  %v123 = vand.u32 %v121, 15
  %v124 = vsub.s32 0, %v123
  %v125 = vsel %vm119, %v124, %v123
  %vm126 = vcmp.lt.s32.totalorder %v50, 0
  %v127 = vsub.s32 0, %v50
  %v128 = vsel %vm126, %v127, %v50
  %v129 = vshrl.u32 %v128, 4
  %v130 = vand.u32 %v128, 15
  %v131 = vsub.s32 0, %v130
  %v132 = vsel %vm126, %v131, %v130
  %vm133 = vcmp.lt.s32.totalorder %v51, 0
  %v134 = vsub.s32 0, %v51
  %v135 = vsel %vm133, %v134, %v51
  %v136 = vshrl.u32 %v135, 4
  %v137 = vand.u32 %v135, 15
  %v138 = vsub.s32 0, %v137
  %v139 = vsel %vm133, %v138, %v137
  %vm140 = vcmp.lt.s32.totalorder %v52, 0
  %v141 = vsub.s32 0, %v52
  %v142 = vsel %vm140, %v141, %v52
  %v143 = vshrl.u32 %v142, 4
  %v144 = vand.u32 %v142, 15
  %v145 = vsub.s32 0, %v144
  %v146 = vsel %vm140, %v145, %v144
  %vm147 = vcmp.lt.s32.totalorder %v53, 0
  %v148 = vsub.s32 0, %v53
  %v149 = vsel %vm147, %v148, %v53
  %v150 = vshrl.u32 %v149, 4
  %v151 = vand.u32 %v149, 15
  %v152 = vsub.s32 0, %v151
  %v153 = vsel %vm147, %v152, %v151
  %vm154 = vcmp.lt.s32.totalorder %v54, 0
  %v155 = vsub.s32 0, %v54
  %v156 = vsel %vm154, %v155, %v54
  %v157 = vshrl.u32 %v156, 4
  %v158 = vand.u32 %v156, 15
  %v159 = vsub.s32 0, %v158
  %v160 = vsel %vm154, %v159, %v158
  %vm161 = vcmp.lt.s32.totalorder %v55, 0
  %v162 = vsub.s32 0, %v55
  %v163 = vsel %vm161, %v162, %v55
  %v164 = vshrl.u32 %v163, 4
  %v165 = vand.u32 %v163, 15
  %v166 = vsub.s32 0, %v165
  %v167 = vsel %vm161, %v166, %v165
  %vm168 = vcmp.ne.s32.totalorder %v62, 0
  %vm169 = vcmp.ne.s32.totalorder %v69, 0
  %vm170 = vcmp.ne.s32.totalorder %v76, 0
  %vm171 = vcmp.ne.s32.totalorder %v83, 0
  %vm172 = vcmp.ne.s32.totalorder %v90, 0
  %vm173 = vcmp.ne.s32.totalorder %v97, 0
  %vm174 = vcmp.ne.s32.totalorder %v104, 0
  %vm175 = vcmp.ne.s32.totalorder %v111, 0
  %vm176 = vcmp.ne.s32.totalorder %v118, 0
  %vm177 = vcmp.ne.s32.totalorder %v125, 0
  %vm178 = vcmp.ne.s32.totalorder %v132, 0
  %vm179 = vcmp.ne.s32.totalorder %v139, 0
  %vm180 = vcmp.ne.s32.totalorder %v146, 0
  %vm181 = vcmp.ne.s32.totalorder %v153, 0
  %vm182 = vcmp.ne.s32.totalorder %v160, 0
  %vm183 = vcmp.ne.s32.totalorder %v167, 0
  %vm184 = vcmp.lt.s32.totalorder %v62, 0
  %vm185 = vcmp.lt.s32.totalorder %v69, 0
  %vm186 = vcmp.lt.s32.totalorder %v76, 0
  %vm187 = vcmp.lt.s32.totalorder %v83, 0
  %vm188 = vcmp.lt.s32.totalorder %v90, 0
  %vm189 = vcmp.lt.s32.totalorder %v97, 0
  %vm190 = vcmp.lt.s32.totalorder %v104, 0
  %vm191 = vcmp.lt.s32.totalorder %v111, 0
  %vm192 = vcmp.lt.s32.totalorder %v118, 0
  %vm193 = vcmp.lt.s32.totalorder %v125, 0
  %vm194 = vcmp.lt.s32.totalorder %v132, 0
  %vm195 = vcmp.lt.s32.totalorder %v139, 0
  %vm196 = vcmp.lt.s32.totalorder %v146, 0
  %vm197 = vcmp.lt.s32.totalorder %v153, 0
  %vm198 = vcmp.lt.s32.totalorder %v160, 0
  %vm199 = vcmp.lt.s32.totalorder %v167, 0
  %vm200 = vmand %vm184, %vm168
  %vm201 = vmand %vm185, %vm169
  %vm202 = vmand %vm186, %vm170
  %vm203 = vmand %vm187, %vm171
  %vm204 = vmand %vm188, %vm172
  %vm205 = vmand %vm189, %vm173
  %vm206 = vmand %vm190, %vm174
  %vm207 = vmand %vm191, %vm175
  %vm208 = vmand %vm192, %vm176
  %vm209 = vmand %vm193, %vm177
  %vm210 = vmand %vm194, %vm178
  %vm211 = vmand %vm195, %vm179
  %vm212 = vmand %vm196, %vm180
  %vm213 = vmand %vm197, %vm181
  %vm214 = vmand %vm198, %vm182
  %vm215 = vmand %vm199, %vm183
  %v216 = vadd.s32 %v62, 16
  %v217 = vadd.s32 %v69, 16
  %v218 = vadd.s32 %v76, 16
  %v219 = vadd.s32 %v83, 16
  %v220 = vadd.s32 %v90, 16
  %v221 = vadd.s32 %v97, 16
  %v222 = vadd.s32 %v104, 16
  %v223 = vadd.s32 %v111, 16
  %v224 = vadd.s32 %v118, 16
  %v225 = vadd.s32 %v125, 16
  %v226 = vadd.s32 %v132, 16
  %v227 = vadd.s32 %v139, 16
  %v228 = vadd.s32 %v146, 16
  %v229 = vadd.s32 %v153, 16
  %v230 = vadd.s32 %v160, 16
  %v231 = vadd.s32 %v167, 16
  %v232 = vsel %vm200, %v216, %v62
  %v233 = vsel %vm201, %v217, %v69
  %v234 = vsel %vm202, %v218, %v76
  %v235 = vsel %vm203, %v219, %v83
  %v236 = vsel %vm204, %v220, %v90
  %v237 = vsel %vm205, %v221, %v97
  %v238 = vsel %vm206, %v222, %v104
  %v239 = vsel %vm207, %v223, %v111
  %v240 = vsel %vm208, %v224, %v118
  %v241 = vsel %vm209, %v225, %v125
  %v242 = vsel %vm210, %v226, %v132
  %v243 = vsel %vm211, %v227, %v139
  %v244 = vsel %vm212, %v228, %v146
  %v245 = vsel %vm213, %v229, %v153
  %v246 = vsel %vm214, %v230, %v160
  %v247 = vsel %vm215, %v231, %v167
  %v248 = vld [vmem:[%s0] sm:$0xff]
  %v249 = vld [vmem:[%s0 + $0x8] sm:$0xff]
  %v250 = vld [vmem:[%s0 + $0x10] sm:$0xff]
  %v251 = vld [vmem:[%s0 + $0x18] sm:$0xff]
  %v252 = vld [vmem:[%s0 + $0x20] sm:$0xff]
  %v253 = vld [vmem:[%s0 + $0x28] sm:$0xff]
  %v254 = vld [vmem:[%s0 + $0x30] sm:$0xff]
  %v255 = vld [vmem:[%s0 + $0x38] sm:$0xff]
  %v256 = vld [vmem:[%s0 + $0x40] sm:$0xff]
  %v257 = vld [vmem:[%s0 + $0x48] sm:$0xff]
  %v258 = vld [vmem:[%s0 + $0x50] sm:$0xff]
  %v259 = vld [vmem:[%s0 + $0x58] sm:$0xff]
  %v260 = vld [vmem:[%s0 + $0x60] sm:$0xff]
  %v261 = vld [vmem:[%s0 + $0x68] sm:$0xff]
  %v262 = vld [vmem:[%s0 + $0x70] sm:$0xff]
  %v263 = vld [vmem:[%s0 + $0x78] sm:$0xff]
  %v264 = vrot.slane %v248, 5
  %v265 = vrot.slane %v249, 5
  %v266 = vrot.slane %v250, 5
  %v267 = vrot.slane %v251, 5
  %v268 = vrot.slane %v252, 5
  %v269 = vrot.slane %v253, 5
  %v270 = vrot.slane %v254, 5
  %v271 = vrot.slane %v255, 5
  %v272 = vrot.slane %v256, 5
  %v273 = vrot.slane %v257, 5
  %v274 = vrot.slane %v258, 5
  %v275 = vrot.slane %v259, 5
  %v276 = vrot.slane %v260, 5
  %v277 = vrot.slane %v261, 5
  %v278 = vrot.slane %v262, 5
  %v279 = vrot.slane %v263, 5
  %vm280 = vcmp.lt.s32.totalorder %v40, 3
  %v281 = vsel %vm280, %v278, %v279
  %v282 = vsel %vm280, %v277, %v278
  %v283 = vsel %vm280, %v276, %v277
  %v284 = vsel %vm280, %v275, %v276
  %v285 = vsel %vm280, %v274, %v275
  %v286 = vsel %vm280, %v273, %v274
  %v287 = vsel %vm280, %v272, %v273
  %v288 = vsel %vm280, %v271, %v272
  %v289 = vsel %vm280, %v270, %v271
  %v290 = vsel %vm280, %v269, %v270
  %v291 = vsel %vm280, %v268, %v269
  %v292 = vsel %vm280, %v267, %v268
  %v293 = vsel %vm280, %v266, %v267
  %v294 = vsel %vm280, %v265, %v266
  %v295 = vsel %vm280, %v264, %v265
  %v296 = vsel %vm280, %v279, %v264
  %vm297 = vcmp.ge.s32.totalorder %v232, 3
  %vm298 = vcmp.ge.s32.totalorder %v233, 3
  %vm299 = vcmp.ge.s32.totalorder %v234, 3
  %vm300 = vcmp.ge.s32.totalorder %v235, 3
  %vm301 = vcmp.ge.s32.totalorder %v236, 3
  %vm302 = vcmp.ge.s32.totalorder %v237, 3
  %vm303 = vcmp.ge.s32.totalorder %v238, 3
  %vm304 = vcmp.ge.s32.totalorder %v239, 3
  %vm305 = vcmp.ge.s32.totalorder %v240, 3
  %vm306 = vcmp.ge.s32.totalorder %v241, 3
  %vm307 = vcmp.ge.s32.totalorder %v242, 3
  %vm308 = vcmp.ge.s32.totalorder %v243, 3
  %vm309 = vcmp.ge.s32.totalorder %v244, 3
  %vm310 = vcmp.ge.s32.totalorder %v245, 3
  %vm311 = vcmp.ge.s32.totalorder %v246, 3
  %vm312 = vcmp.ge.s32.totalorder %v247, 3
  %vm313 = vcmp.lt.s32.totalorder %v232, 19
  %vm314 = vcmp.lt.s32.totalorder %v233, 19
  %vm315 = vcmp.lt.s32.totalorder %v234, 19
  %vm316 = vcmp.lt.s32.totalorder %v235, 19
  %vm317 = vcmp.lt.s32.totalorder %v236, 19
  %vm318 = vcmp.lt.s32.totalorder %v237, 19
  %vm319 = vcmp.lt.s32.totalorder %v238, 19
  %vm320 = vcmp.lt.s32.totalorder %v239, 19
  %vm321 = vcmp.lt.s32.totalorder %v240, 19
  %vm322 = vcmp.lt.s32.totalorder %v241, 19
  %vm323 = vcmp.lt.s32.totalorder %v242, 19
  %vm324 = vcmp.lt.s32.totalorder %v243, 19
  %vm325 = vcmp.lt.s32.totalorder %v244, 19
  %vm326 = vcmp.lt.s32.totalorder %v245, 19
  %vm327 = vcmp.lt.s32.totalorder %v246, 19
  %vm328 = vcmp.lt.s32.totalorder %v247, 19
  %vm329 = vmand %vm297, %vm313
  %vm330 = vmand %vm298, %vm314
  %vm331 = vmand %vm299, %vm315
  %vm332 = vmand %vm300, %vm316
  %vm333 = vmand %vm301, %vm317
  %vm334 = vmand %vm302, %vm318
  %vm335 = vmand %vm303, %vm319
  %vm336 = vmand %vm304, %vm320
  %vm337 = vmand %vm305, %vm321
  %vm338 = vmand %vm306, %vm322
  %vm339 = vmand %vm307, %vm323
  %vm340 = vmand %vm308, %vm324
  %vm341 = vmand %vm309, %vm325
  %vm342 = vmand %vm310, %vm326
  %vm343 = vmand %vm311, %vm327
  %vm344 = vmand %vm312, %vm328
  %v345 = vsel %vm329, 1, 0
  %v346 = vsel %vm330, 1, 0
  %v347 = vsel %vm331, 1, 0
  %v348 = vsel %vm332, 1, 0
  %v349 = vsel %vm333, 1, 0
  %v350 = vsel %vm334, 1, 0
  %v351 = vsel %vm335, 1, 0
  %v352 = vsel %vm336, 1, 0
  %v353 = vsel %vm337, 1, 0
  %v354 = vsel %vm338, 1, 0
  %v355 = vsel %vm339, 1, 0
  %v356 = vsel %vm340, 1, 0
  %v357 = vsel %vm341, 1, 0
  %v358 = vsel %vm342, 1, 0
  %v359 = vsel %vm343, 1, 0
  %v360 = vsel %vm344, 1, 0
  %vm361 = vcmp.eq.s32.totalorder %v345, 1
  %vm362 = vcmp.eq.s32.totalorder %v346, 1
  %vm363 = vcmp.eq.s32.totalorder %v347, 1
  %vm364 = vcmp.eq.s32.totalorder %v348, 1
  %vm365 = vcmp.eq.s32.totalorder %v349, 1
  %vm366 = vcmp.eq.s32.totalorder %v350, 1
  %vm367 = vcmp.eq.s32.totalorder %v351, 1
  %vm368 = vcmp.eq.s32.totalorder %v352, 1
  %vm369 = vcmp.eq.s32.totalorder %v353, 1
  %vm370 = vcmp.eq.s32.totalorder %v354, 1
  %vm371 = vcmp.eq.s32.totalorder %v355, 1
  %vm372 = vcmp.eq.s32.totalorder %v356, 1
  %vm373 = vcmp.eq.s32.totalorder %v357, 1
  %vm374 = vcmp.eq.s32.totalorder %v358, 1
  %vm375 = vcmp.eq.s32.totalorder %v359, 1
  %vm376 = vcmp.eq.s32.totalorder %v360, 1
  %v377 = vsel %vm361, %v296, 0.0
  %v378 = vsel %vm362, %v295, 0.0
  %v379 = vsel %vm363, %v294, 0.0
  %v380 = vsel %vm364, %v293, 0.0
  %v381 = vsel %vm365, %v292, 0.0
  %v382 = vsel %vm366, %v291, 0.0
  %v383 = vsel %vm367, %v290, 0.0
  %v384 = vsel %vm368, %v289, 0.0
  %v385 = vsel %vm369, %v288, 0.0
  %v386 = vsel %vm370, %v287, 0.0
  %v387 = vsel %vm371, %v286, 0.0
  %v388 = vsel %vm372, %v285, 0.0
  %v389 = vsel %vm373, %v284, 0.0
  %v390 = vsel %vm374, %v283, 0.0
  %v391 = vsel %vm375, %v282, 0.0
  %v392 = vsel %vm376, %v281, 0.0
  %v393 = vrot.slane %v248, 6
  %v394 = vrot.slane %v249, 6
  %v395 = vrot.slane %v250, 6
  %v396 = vrot.slane %v251, 6
  %v397 = vrot.slane %v252, 6
  %v398 = vrot.slane %v253, 6
  %v399 = vrot.slane %v254, 6
  %v400 = vrot.slane %v255, 6
  %v401 = vrot.slane %v256, 6
  %v402 = vrot.slane %v257, 6
  %v403 = vrot.slane %v258, 6
  %v404 = vrot.slane %v259, 6
  %v405 = vrot.slane %v260, 6
  %v406 = vrot.slane %v261, 6
  %v407 = vrot.slane %v262, 6
  %v408 = vrot.slane %v263, 6
  %vm409 = vcmp.lt.s32.totalorder %v40, 2
  %v410 = vsel %vm409, %v407, %v408
  %v411 = vsel %vm409, %v406, %v407
  %v412 = vsel %vm409, %v405, %v406
  %v413 = vsel %vm409, %v404, %v405
  %v414 = vsel %vm409, %v403, %v404
  %v415 = vsel %vm409, %v402, %v403
  %v416 = vsel %vm409, %v401, %v402
  %v417 = vsel %vm409, %v400, %v401
  %v418 = vsel %vm409, %v399, %v400
  %v419 = vsel %vm409, %v398, %v399
  %v420 = vsel %vm409, %v397, %v398
  %v421 = vsel %vm409, %v396, %v397
  %v422 = vsel %vm409, %v395, %v396
  %v423 = vsel %vm409, %v394, %v395
  %v424 = vsel %vm409, %v393, %v394
  %v425 = vsel %vm409, %v408, %v393
  %vm426 = vcmp.ge.s32.totalorder %v232, 2
  %vm427 = vcmp.ge.s32.totalorder %v233, 2
  %vm428 = vcmp.ge.s32.totalorder %v234, 2
  %vm429 = vcmp.ge.s32.totalorder %v235, 2
  %vm430 = vcmp.ge.s32.totalorder %v236, 2
  %vm431 = vcmp.ge.s32.totalorder %v237, 2
  %vm432 = vcmp.ge.s32.totalorder %v238, 2
  %vm433 = vcmp.ge.s32.totalorder %v239, 2
  %vm434 = vcmp.ge.s32.totalorder %v240, 2
  %vm435 = vcmp.ge.s32.totalorder %v241, 2
  %vm436 = vcmp.ge.s32.totalorder %v242, 2
  %vm437 = vcmp.ge.s32.totalorder %v243, 2
  %vm438 = vcmp.ge.s32.totalorder %v244, 2
  %vm439 = vcmp.ge.s32.totalorder %v245, 2
  %vm440 = vcmp.ge.s32.totalorder %v246, 2
  %vm441 = vcmp.ge.s32.totalorder %v247, 2
  %vm442 = vcmp.lt.s32.totalorder %v232, 18
  %vm443 = vcmp.lt.s32.totalorder %v233, 18
  %vm444 = vcmp.lt.s32.totalorder %v234, 18
  %vm445 = vcmp.lt.s32.totalorder %v235, 18
  %vm446 = vcmp.lt.s32.totalorder %v236, 18
  %vm447 = vcmp.lt.s32.totalorder %v237, 18
  %vm448 = vcmp.lt.s32.totalorder %v238, 18
  %vm449 = vcmp.lt.s32.totalorder %v239, 18
  %vm450 = vcmp.lt.s32.totalorder %v240, 18
  %vm451 = vcmp.lt.s32.totalorder %v241, 18
  %vm452 = vcmp.lt.s32.totalorder %v242, 18
  %vm453 = vcmp.lt.s32.totalorder %v243, 18
  %vm454 = vcmp.lt.s32.totalorder %v244, 18
  %vm455 = vcmp.lt.s32.totalorder %v245, 18
  %vm456 = vcmp.lt.s32.totalorder %v246, 18
  %vm457 = vcmp.lt.s32.totalorder %v247, 18
  %vm458 = vmand %vm426, %vm442
  %vm459 = vmand %vm427, %vm443
  %vm460 = vmand %vm428, %vm444
  %vm461 = vmand %vm429, %vm445
  %vm462 = vmand %vm430, %vm446
  %vm463 = vmand %vm431, %vm447
  %vm464 = vmand %vm432, %vm448
  %vm465 = vmand %vm433, %vm449
  %vm466 = vmand %vm434, %vm450
  %vm467 = vmand %vm435, %vm451
  %vm468 = vmand %vm436, %vm452
  %vm469 = vmand %vm437, %vm453
  %vm470 = vmand %vm438, %vm454
  %vm471 = vmand %vm439, %vm455
  %vm472 = vmand %vm440, %vm456
  %vm473 = vmand %vm441, %vm457
  %v474 = vsel %vm458, 1, 0
  %v475 = vsel %vm459, 1, 0
  %v476 = vsel %vm460, 1, 0
  %v477 = vsel %vm461, 1, 0
  %v478 = vsel %vm462, 1, 0
  %v479 = vsel %vm463, 1, 0
  %v480 = vsel %vm464, 1, 0
  %v481 = vsel %vm465, 1, 0
  %v482 = vsel %vm466, 1, 0
  %v483 = vsel %vm467, 1, 0
  %v484 = vsel %vm468, 1, 0
  %v485 = vsel %vm469, 1, 0
  %v486 = vsel %vm470, 1, 0
  %v487 = vsel %vm471, 1, 0
  %v488 = vsel %vm472, 1, 0
  %v489 = vsel %vm473, 1, 0
  %vm490 = vcmp.eq.s32.totalorder %v474, 1
  %vm491 = vcmp.eq.s32.totalorder %v475, 1
  %vm492 = vcmp.eq.s32.totalorder %v476, 1
  %vm493 = vcmp.eq.s32.totalorder %v477, 1
  %vm494 = vcmp.eq.s32.totalorder %v478, 1
  %vm495 = vcmp.eq.s32.totalorder %v479, 1
  %vm496 = vcmp.eq.s32.totalorder %v480, 1
  %vm497 = vcmp.eq.s32.totalorder %v481, 1
  %vm498 = vcmp.eq.s32.totalorder %v482, 1
  %vm499 = vcmp.eq.s32.totalorder %v483, 1
  %vm500 = vcmp.eq.s32.totalorder %v484, 1
  %vm501 = vcmp.eq.s32.totalorder %v485, 1
  %vm502 = vcmp.eq.s32.totalorder %v486, 1
  %vm503 = vcmp.eq.s32.totalorder %v487, 1
  %vm504 = vcmp.eq.s32.totalorder %v488, 1
  %vm505 = vcmp.eq.s32.totalorder %v489, 1
  %v506 = vsel %vm490, %v425, 0.0
  %v507 = vsel %vm491, %v424, 0.0
  %v508 = vsel %vm492, %v423, 0.0
  %v509 = vsel %vm493, %v422, 0.0
  %v510 = vsel %vm494, %v421, 0.0
  %v511 = vsel %vm495, %v420, 0.0
  %v512 = vsel %vm496, %v419, 0.0
  %v513 = vsel %vm497, %v418, 0.0
  %v514 = vsel %vm498, %v417, 0.0
  %v515 = vsel %vm499, %v416, 0.0
  %v516 = vsel %vm500, %v415, 0.0
  %v517 = vsel %vm501, %v414, 0.0
  %v518 = vsel %vm502, %v413, 0.0
  %v519 = vsel %vm503, %v412, 0.0
  %v520 = vsel %vm504, %v411, 0.0
  %v521 = vsel %vm505, %v410, 0.0
  %v522 = vrot.slane %v248, 7
  %v523 = vrot.slane %v249, 7
  %v524 = vrot.slane %v250, 7
  %v525 = vrot.slane %v251, 7
  %v526 = vrot.slane %v252, 7
  %v527 = vrot.slane %v253, 7
  %v528 = vrot.slane %v254, 7
  %v529 = vrot.slane %v255, 7
  %v530 = vrot.slane %v256, 7
  %v531 = vrot.slane %v257, 7
  %v532 = vrot.slane %v258, 7
  %v533 = vrot.slane %v259, 7
  %v534 = vrot.slane %v260, 7
  %v535 = vrot.slane %v261, 7
  %v536 = vrot.slane %v262, 7
  %v537 = vrot.slane %v263, 7
  %vm538 = vcmp.lt.s32.totalorder %v40, 1
  %v539 = vsel %vm538, %v536, %v537
  %v540 = vsel %vm538, %v535, %v536
  %v541 = vsel %vm538, %v534, %v535
  %v542 = vsel %vm538, %v533, %v534
  %v543 = vsel %vm538, %v532, %v533
  %v544 = vsel %vm538, %v531, %v532
  %v545 = vsel %vm538, %v530, %v531
  %v546 = vsel %vm538, %v529, %v530
  %v547 = vsel %vm538, %v528, %v529
  %v548 = vsel %vm538, %v527, %v528
  %v549 = vsel %vm538, %v526, %v527
  %v550 = vsel %vm538, %v525, %v526
  %v551 = vsel %vm538, %v524, %v525
  %v552 = vsel %vm538, %v523, %v524
  %v553 = vsel %vm538, %v522, %v523
  %v554 = vsel %vm538, %v537, %v522
  %vm555 = vcmp.ge.s32.totalorder %v232, 1
  %vm556 = vcmp.ge.s32.totalorder %v233, 1
  %vm557 = vcmp.ge.s32.totalorder %v234, 1
  %vm558 = vcmp.ge.s32.totalorder %v235, 1
  %vm559 = vcmp.ge.s32.totalorder %v236, 1
  %vm560 = vcmp.ge.s32.totalorder %v237, 1
  %vm561 = vcmp.ge.s32.totalorder %v238, 1
  %vm562 = vcmp.ge.s32.totalorder %v239, 1
  %vm563 = vcmp.ge.s32.totalorder %v240, 1
  %vm564 = vcmp.ge.s32.totalorder %v241, 1
  %vm565 = vcmp.ge.s32.totalorder %v242, 1
  %vm566 = vcmp.ge.s32.totalorder %v243, 1
  %vm567 = vcmp.ge.s32.totalorder %v244, 1
  %vm568 = vcmp.ge.s32.totalorder %v245, 1
  %vm569 = vcmp.ge.s32.totalorder %v246, 1
  %vm570 = vcmp.ge.s32.totalorder %v247, 1
  %vm571 = vcmp.lt.s32.totalorder %v232, 17
  %vm572 = vcmp.lt.s32.totalorder %v233, 17
  %vm573 = vcmp.lt.s32.totalorder %v234, 17
  %vm574 = vcmp.lt.s32.totalorder %v235, 17
  %vm575 = vcmp.lt.s32.totalorder %v236, 17
  %vm576 = vcmp.lt.s32.totalorder %v237, 17
  %vm577 = vcmp.lt.s32.totalorder %v238, 17
  %vm578 = vcmp.lt.s32.totalorder %v239, 17
  %vm579 = vcmp.lt.s32.totalorder %v240, 17
  %vm580 = vcmp.lt.s32.totalorder %v241, 17
  %vm581 = vcmp.lt.s32.totalorder %v242, 17
  %vm582 = vcmp.lt.s32.totalorder %v243, 17
  %vm583 = vcmp.lt.s32.totalorder %v244, 17
  %vm584 = vcmp.lt.s32.totalorder %v245, 17
  %vm585 = vcmp.lt.s32.totalorder %v246, 17
  %vm586 = vcmp.lt.s32.totalorder %v247, 17
  %vm587 = vmand %vm555, %vm571
  %vm588 = vmand %vm556, %vm572
  %vm589 = vmand %vm557, %vm573
  %vm590 = vmand %vm558, %vm574
  %vm591 = vmand %vm559, %vm575
  %vm592 = vmand %vm560, %vm576
  %vm593 = vmand %vm561, %vm577
  %vm594 = vmand %vm562, %vm578
  %vm595 = vmand %vm563, %vm579
  %vm596 = vmand %vm564, %vm580
  %vm597 = vmand %vm565, %vm581
  %vm598 = vmand %vm566, %vm582
  %vm599 = vmand %vm567, %vm583
  %vm600 = vmand %vm568, %vm584
  %vm601 = vmand %vm569, %vm585
  %vm602 = vmand %vm570, %vm586
  %v603 = vsel %vm587, 1, 0
  %v604 = vsel %vm588, 1, 0
  %v605 = vsel %vm589, 1, 0
  %v606 = vsel %vm590, 1, 0
  %v607 = vsel %vm591, 1, 0
  %v608 = vsel %vm592, 1, 0
  %v609 = vsel %vm593, 1, 0
  %v610 = vsel %vm594, 1, 0
  %v611 = vsel %vm595, 1, 0
  %v612 = vsel %vm596, 1, 0
  %v613 = vsel %vm597, 1, 0
  %v614 = vsel %vm598, 1, 0
  %v615 = vsel %vm599, 1, 0
  %v616 = vsel %vm600, 1, 0
  %v617 = vsel %vm601, 1, 0
  %v618 = vsel %vm602, 1, 0
  %vm619 = vcmp.eq.s32.totalorder %v603, 1
  %vm620 = vcmp.eq.s32.totalorder %v604, 1
  %vm621 = vcmp.eq.s32.totalorder %v605, 1
  %vm622 = vcmp.eq.s32.totalorder %v606, 1
  %vm623 = vcmp.eq.s32.totalorder %v607, 1
  %vm624 = vcmp.eq.s32.totalorder %v608, 1
  %vm625 = vcmp.eq.s32.totalorder %v609, 1
  %vm626 = vcmp.eq.s32.totalorder %v610, 1
  %vm627 = vcmp.eq.s32.totalorder %v611, 1
  %vm628 = vcmp.eq.s32.totalorder %v612, 1
  %vm629 = vcmp.eq.s32.totalorder %v613, 1
  %vm630 = vcmp.eq.s32.totalorder %v614, 1
  %vm631 = vcmp.eq.s32.totalorder %v615, 1
  %vm632 = vcmp.eq.s32.totalorder %v616, 1
  %vm633 = vcmp.eq.s32.totalorder %v617, 1
  %vm634 = vcmp.eq.s32.totalorder %v618, 1
  %v635 = vsel %vm619, %v554, 0.0
  %v636 = vsel %vm620, %v553, 0.0
  %v637 = vsel %vm621, %v552, 0.0
  %v638 = vsel %vm622, %v551, 0.0
  %v639 = vsel %vm623, %v550, 0.0
  %v640 = vsel %vm624, %v549, 0.0
  %v641 = vsel %vm625, %v548, 0.0
  %v642 = vsel %vm626, %v547, 0.0
  %v643 = vsel %vm627, %v546, 0.0
  %v644 = vsel %vm628, %v545, 0.0
  %v645 = vsel %vm629, %v544, 0.0
  %v646 = vsel %vm630, %v543, 0.0
  %v647 = vsel %vm631, %v542, 0.0
  %v648 = vsel %vm632, %v541, 0.0
  %v649 = vsel %vm633, %v540, 0.0
  %v650 = vsel %vm634, %v539, 0.0
  %v651 = vrot.slane %v248, 1
  %v652 = vrot.slane %v249, 1
  %v653 = vrot.slane %v250, 1
  %v654 = vrot.slane %v251, 1
  %v655 = vrot.slane %v252, 1
  %v656 = vrot.slane %v253, 1
  %v657 = vrot.slane %v254, 1
  %v658 = vrot.slane %v255, 1
  %v659 = vrot.slane %v256, 1
  %v660 = vrot.slane %v257, 1
  %v661 = vrot.slane %v258, 1
  %v662 = vrot.slane %v259, 1
  %v663 = vrot.slane %v260, 1
  %v664 = vrot.slane %v261, 1
  %v665 = vrot.slane %v262, 1
  %v666 = vrot.slane %v263, 1
  %vm667 = vcmp.lt.s32.totalorder %v40, 7
  %v668 = vsel %vm667, %v665, %v666
  %v669 = vsel %vm667, %v664, %v665
  %v670 = vsel %vm667, %v663, %v664
  %v671 = vsel %vm667, %v662, %v663
  %v672 = vsel %vm667, %v661, %v662
  %v673 = vsel %vm667, %v660, %v661
  %v674 = vsel %vm667, %v659, %v660
  %v675 = vsel %vm667, %v658, %v659
  %v676 = vsel %vm667, %v657, %v658
  %v677 = vsel %vm667, %v656, %v657
  %v678 = vsel %vm667, %v655, %v656
  %v679 = vsel %vm667, %v654, %v655
  %v680 = vsel %vm667, %v653, %v654
  %v681 = vsel %vm667, %v652, %v653
  %v682 = vsel %vm667, %v651, %v652
  %v683 = vsel %vm667, %v666, %v651
  %vm684 = vcmp.ge.s32.totalorder %v232, 4294967295
  %vm685 = vcmp.ge.s32.totalorder %v233, 4294967295
  %vm686 = vcmp.ge.s32.totalorder %v234, 4294967295
  %vm687 = vcmp.ge.s32.totalorder %v235, 4294967295
  %vm688 = vcmp.ge.s32.totalorder %v236, 4294967295
  %vm689 = vcmp.ge.s32.totalorder %v237, 4294967295
  %vm690 = vcmp.ge.s32.totalorder %v238, 4294967295
  %vm691 = vcmp.ge.s32.totalorder %v239, 4294967295
  %vm692 = vcmp.ge.s32.totalorder %v240, 4294967295
  %vm693 = vcmp.ge.s32.totalorder %v241, 4294967295
  %vm694 = vcmp.ge.s32.totalorder %v242, 4294967295
  %vm695 = vcmp.ge.s32.totalorder %v243, 4294967295
  %vm696 = vcmp.ge.s32.totalorder %v244, 4294967295
  %vm697 = vcmp.ge.s32.totalorder %v245, 4294967295
  %vm698 = vcmp.ge.s32.totalorder %v246, 4294967295
  %vm699 = vcmp.ge.s32.totalorder %v247, 4294967295
  %vm700 = vcmp.lt.s32.totalorder %v232, 15
  %vm701 = vcmp.lt.s32.totalorder %v233, 15
  %vm702 = vcmp.lt.s32.totalorder %v234, 15
  %vm703 = vcmp.lt.s32.totalorder %v235, 15
  %vm704 = vcmp.lt.s32.totalorder %v236, 15
  %vm705 = vcmp.lt.s32.totalorder %v237, 15
  %vm706 = vcmp.lt.s32.totalorder %v238, 15
  %vm707 = vcmp.lt.s32.totalorder %v239, 15
  %vm708 = vcmp.lt.s32.totalorder %v240, 15
  %vm709 = vcmp.lt.s32.totalorder %v241, 15
  %vm710 = vcmp.lt.s32.totalorder %v242, 15
  %vm711 = vcmp.lt.s32.totalorder %v243, 15
  %vm712 = vcmp.lt.s32.totalorder %v244, 15
  %vm713 = vcmp.lt.s32.totalorder %v245, 15
  %vm714 = vcmp.lt.s32.totalorder %v246, 15
  %vm715 = vcmp.lt.s32.totalorder %v247, 15
  %vm716 = vmand %vm684, %vm700
  %vm717 = vmand %vm685, %vm701
  %vm718 = vmand %vm686, %vm702
  %vm719 = vmand %vm687, %vm703
  %vm720 = vmand %vm688, %vm704
  %vm721 = vmand %vm689, %vm705
  %vm722 = vmand %vm690, %vm706
  %vm723 = vmand %vm691, %vm707
  %vm724 = vmand %vm692, %vm708
  %vm725 = vmand %vm693, %vm709
  %vm726 = vmand %vm694, %vm710
  %vm727 = vmand %vm695, %vm711
  %vm728 = vmand %vm696, %vm712
  %vm729 = vmand %vm697, %vm713
  %vm730 = vmand %vm698, %vm714
  %vm731 = vmand %vm699, %vm715
  %v732 = vsel %vm716, 1, 0
  %v733 = vsel %vm717, 1, 0
  %v734 = vsel %vm718, 1, 0
  %v735 = vsel %vm719, 1, 0
  %v736 = vsel %vm720, 1, 0
  %v737 = vsel %vm721, 1, 0
  %v738 = vsel %vm722, 1, 0
  %v739 = vsel %vm723, 1, 0
  %v740 = vsel %vm724, 1, 0
  %v741 = vsel %vm725, 1, 0
  %v742 = vsel %vm726, 1, 0
  %v743 = vsel %vm727, 1, 0
  %v744 = vsel %vm728, 1, 0
  %v745 = vsel %vm729, 1, 0
  %v746 = vsel %vm730, 1, 0
  %v747 = vsel %vm731, 1, 0
  %vm748 = vcmp.eq.s32.totalorder %v732, 1
  %vm749 = vcmp.eq.s32.totalorder %v733, 1
  %vm750 = vcmp.eq.s32.totalorder %v734, 1
  %vm751 = vcmp.eq.s32.totalorder %v735, 1
  %vm752 = vcmp.eq.s32.totalorder %v736, 1
  %vm753 = vcmp.eq.s32.totalorder %v737, 1
  %vm754 = vcmp.eq.s32.totalorder %v738, 1
  %vm755 = vcmp.eq.s32.totalorder %v739, 1
  %vm756 = vcmp.eq.s32.totalorder %v740, 1
  %vm757 = vcmp.eq.s32.totalorder %v741, 1
  %vm758 = vcmp.eq.s32.totalorder %v742, 1
  %vm759 = vcmp.eq.s32.totalorder %v743, 1
  %vm760 = vcmp.eq.s32.totalorder %v744, 1
  %vm761 = vcmp.eq.s32.totalorder %v745, 1
  %vm762 = vcmp.eq.s32.totalorder %v746, 1
  %vm763 = vcmp.eq.s32.totalorder %v747, 1
  %v764 = vsel %vm748, %v682, 0.0
  %v765 = vsel %vm749, %v681, 0.0
  %v766 = vsel %vm750, %v680, 0.0
  %v767 = vsel %vm751, %v679, 0.0
  %v768 = vsel %vm752, %v678, 0.0
  %v769 = vsel %vm753, %v677, 0.0
  %v770 = vsel %vm754, %v676, 0.0
  %v771 = vsel %vm755, %v675, 0.0
  %v772 = vsel %vm756, %v674, 0.0
  %v773 = vsel %vm757, %v673, 0.0
  %v774 = vsel %vm758, %v672, 0.0
  %v775 = vsel %vm759, %v671, 0.0
  %v776 = vsel %vm760, %v670, 0.0
  %v777 = vsel %vm761, %v669, 0.0
  %v778 = vsel %vm762, %v668, 0.0
  %v779 = vsel %vm763, %v683, 0.0
  %v780 = vrot.slane %v248, 2
  %v781 = vrot.slane %v249, 2
  %v782 = vrot.slane %v250, 2
  %v783 = vrot.slane %v251, 2
  %v784 = vrot.slane %v252, 2
  %v785 = vrot.slane %v253, 2
  %v786 = vrot.slane %v254, 2
  %v787 = vrot.slane %v255, 2
  %v788 = vrot.slane %v256, 2
  %v789 = vrot.slane %v257, 2
  %v790 = vrot.slane %v258, 2
  %v791 = vrot.slane %v259, 2
  %v792 = vrot.slane %v260, 2
  %v793 = vrot.slane %v261, 2
  %v794 = vrot.slane %v262, 2
  %v795 = vrot.slane %v263, 2
  %vm796 = vcmp.lt.s32.totalorder %v40, 6
  %v797 = vsel %vm796, %v794, %v795
  %v798 = vsel %vm796, %v793, %v794
  %v799 = vsel %vm796, %v792, %v793
  %v800 = vsel %vm796, %v791, %v792
  %v801 = vsel %vm796, %v790, %v791
  %v802 = vsel %vm796, %v789, %v790
  %v803 = vsel %vm796, %v788, %v789
  %v804 = vsel %vm796, %v787, %v788
  %v805 = vsel %vm796, %v786, %v787
  %v806 = vsel %vm796, %v785, %v786
  %v807 = vsel %vm796, %v784, %v785
  %v808 = vsel %vm796, %v783, %v784
  %v809 = vsel %vm796, %v782, %v783
  %v810 = vsel %vm796, %v781, %v782
  %v811 = vsel %vm796, %v780, %v781
  %v812 = vsel %vm796, %v795, %v780
  %vm813 = vcmp.ge.s32.totalorder %v232, 4294967294
  %vm814 = vcmp.ge.s32.totalorder %v233, 4294967294
  %vm815 = vcmp.ge.s32.totalorder %v234, 4294967294
  %vm816 = vcmp.ge.s32.totalorder %v235, 4294967294
  %vm817 = vcmp.ge.s32.totalorder %v236, 4294967294
  %vm818 = vcmp.ge.s32.totalorder %v237, 4294967294
  %vm819 = vcmp.ge.s32.totalorder %v238, 4294967294
  %vm820 = vcmp.ge.s32.totalorder %v239, 4294967294
  %vm821 = vcmp.ge.s32.totalorder %v240, 4294967294
  %vm822 = vcmp.ge.s32.totalorder %v241, 4294967294
  %vm823 = vcmp.ge.s32.totalorder %v242, 4294967294
  %vm824 = vcmp.ge.s32.totalorder %v243, 4294967294
  %vm825 = vcmp.ge.s32.totalorder %v244, 4294967294
  %vm826 = vcmp.ge.s32.totalorder %v245, 4294967294
  %vm827 = vcmp.ge.s32.totalorder %v246, 4294967294
  %vm828 = vcmp.ge.s32.totalorder %v247, 4294967294
  %vm829 = vcmp.lt.s32.totalorder %v232, 14
  %vm830 = vcmp.lt.s32.totalorder %v233, 14
  %vm831 = vcmp.lt.s32.totalorder %v234, 14
  %vm832 = vcmp.lt.s32.totalorder %v235, 14
  %vm833 = vcmp.lt.s32.totalorder %v236, 14
  %vm834 = vcmp.lt.s32.totalorder %v237, 14
  %vm835 = vcmp.lt.s32.totalorder %v238, 14
  %vm836 = vcmp.lt.s32.totalorder %v239, 14
  %vm837 = vcmp.lt.s32.totalorder %v240, 14
  %vm838 = vcmp.lt.s32.totalorder %v241, 14
  %vm839 = vcmp.lt.s32.totalorder %v242, 14
  %vm840 = vcmp.lt.s32.totalorder %v243, 14
  %vm841 = vcmp.lt.s32.totalorder %v244, 14
  %vm842 = vcmp.lt.s32.totalorder %v245, 14
  %vm843 = vcmp.lt.s32.totalorder %v246, 14
  %vm844 = vcmp.lt.s32.totalorder %v247, 14
  %vm845 = vmand %vm813, %vm829
  %vm846 = vmand %vm814, %vm830
  %vm847 = vmand %vm815, %vm831
  %vm848 = vmand %vm816, %vm832
  %vm849 = vmand %vm817, %vm833
  %vm850 = vmand %vm818, %vm834
  %vm851 = vmand %vm819, %vm835
  %vm852 = vmand %vm820, %vm836
  %vm853 = vmand %vm821, %vm837
  %vm854 = vmand %vm822, %vm838
  %vm855 = vmand %vm823, %vm839
  %vm856 = vmand %vm824, %vm840
  %vm857 = vmand %vm825, %vm841
  %vm858 = vmand %vm826, %vm842
  %vm859 = vmand %vm827, %vm843
  %vm860 = vmand %vm828, %vm844
  %v861 = vsel %vm845, 1, 0
  %v862 = vsel %vm846, 1, 0
  %v863 = vsel %vm847, 1, 0
  %v864 = vsel %vm848, 1, 0
  %v865 = vsel %vm849, 1, 0
  %v866 = vsel %vm850, 1, 0
  %v867 = vsel %vm851, 1, 0
  %v868 = vsel %vm852, 1, 0
  %v869 = vsel %vm853, 1, 0
  %v870 = vsel %vm854, 1, 0
  %v871 = vsel %vm855, 1, 0
  %v872 = vsel %vm856, 1, 0
  %v873 = vsel %vm857, 1, 0
  %v874 = vsel %vm858, 1, 0
  %v875 = vsel %vm859, 1, 0
  %v876 = vsel %vm860, 1, 0
  %vm877 = vcmp.eq.s32.totalorder %v861, 1
  %vm878 = vcmp.eq.s32.totalorder %v862, 1
  %vm879 = vcmp.eq.s32.totalorder %v863, 1
  %vm880 = vcmp.eq.s32.totalorder %v864, 1
  %vm881 = vcmp.eq.s32.totalorder %v865, 1
  %vm882 = vcmp.eq.s32.totalorder %v866, 1
  %vm883 = vcmp.eq.s32.totalorder %v867, 1
  %vm884 = vcmp.eq.s32.totalorder %v868, 1
  %vm885 = vcmp.eq.s32.totalorder %v869, 1
  %vm886 = vcmp.eq.s32.totalorder %v870, 1
  %vm887 = vcmp.eq.s32.totalorder %v871, 1
  %vm888 = vcmp.eq.s32.totalorder %v872, 1
  %vm889 = vcmp.eq.s32.totalorder %v873, 1
  %vm890 = vcmp.eq.s32.totalorder %v874, 1
  %vm891 = vcmp.eq.s32.totalorder %v875, 1
  %vm892 = vcmp.eq.s32.totalorder %v876, 1
  %v893 = vsel %vm877, %v811, 0.0
  %v894 = vsel %vm878, %v810, 0.0
  %v895 = vsel %vm879, %v809, 0.0
  %v896 = vsel %vm880, %v808, 0.0
  %v897 = vsel %vm881, %v807, 0.0
  %v898 = vsel %vm882, %v806, 0.0
  %v899 = vsel %vm883, %v805, 0.0
  %v900 = vsel %vm884, %v804, 0.0
  %v901 = vsel %vm885, %v803, 0.0
  %v902 = vsel %vm886, %v802, 0.0
  %v903 = vsel %vm887, %v801, 0.0
  %v904 = vsel %vm888, %v800, 0.0
  %v905 = vsel %vm889, %v799, 0.0
  %v906 = vsel %vm890, %v798, 0.0
  %v907 = vsel %vm891, %v797, 0.0
  %v908 = vsel %vm892, %v812, 0.0
  %v909 = vrot.slane %v248, 3
  %v910 = vrot.slane %v249, 3
  %v911 = vrot.slane %v250, 3
  %v912 = vrot.slane %v251, 3
  %v913 = vrot.slane %v252, 3
  %v914 = vrot.slane %v253, 3
  %v915 = vrot.slane %v254, 3
  %v916 = vrot.slane %v255, 3
  %v917 = vrot.slane %v256, 3
  %v918 = vrot.slane %v257, 3
  %v919 = vrot.slane %v258, 3
  %v920 = vrot.slane %v259, 3
  %v921 = vrot.slane %v260, 3
  %v922 = vrot.slane %v261, 3
  %v923 = vrot.slane %v262, 3
  %v924 = vrot.slane %v263, 3
  %vm925 = vcmp.lt.s32.totalorder %v40, 5
  %v926 = vsel %vm925, %v923, %v924
  %v927 = vsel %vm925, %v922, %v923
  %v928 = vsel %vm925, %v921, %v922
  %v929 = vsel %vm925, %v920, %v921
  %v930 = vsel %vm925, %v919, %v920
  %v931 = vsel %vm925, %v918, %v919
  %v932 = vsel %vm925, %v917, %v918
  %v933 = vsel %vm925, %v916, %v917
  %v934 = vsel %vm925, %v915, %v916
  %v935 = vsel %vm925, %v914, %v915
  %v936 = vsel %vm925, %v913, %v914
  %v937 = vsel %vm925, %v912, %v913
  %v938 = vsel %vm925, %v911, %v912
  %v939 = vsel %vm925, %v910, %v911
  %v940 = vsel %vm925, %v909, %v910
  %v941 = vsel %vm925, %v924, %v909
  %vm942 = vcmp.ge.s32.totalorder %v232, 4294967293
  %vm943 = vcmp.ge.s32.totalorder %v233, 4294967293
  %vm944 = vcmp.ge.s32.totalorder %v234, 4294967293
  %vm945 = vcmp.ge.s32.totalorder %v235, 4294967293
  %vm946 = vcmp.ge.s32.totalorder %v236, 4294967293
  %vm947 = vcmp.ge.s32.totalorder %v237, 4294967293
  %vm948 = vcmp.ge.s32.totalorder %v238, 4294967293
  %vm949 = vcmp.ge.s32.totalorder %v239, 4294967293
  %vm950 = vcmp.ge.s32.totalorder %v240, 4294967293
  %vm951 = vcmp.ge.s32.totalorder %v241, 4294967293
  %vm952 = vcmp.ge.s32.totalorder %v242, 4294967293
  %vm953 = vcmp.ge.s32.totalorder %v243, 4294967293
  %vm954 = vcmp.ge.s32.totalorder %v244, 4294967293
  %vm955 = vcmp.ge.s32.totalorder %v245, 4294967293
  %vm956 = vcmp.ge.s32.totalorder %v246, 4294967293
  %vm957 = vcmp.ge.s32.totalorder %v247, 4294967293
  %vm958 = vcmp.lt.s32.totalorder %v232, 13
  %vm959 = vcmp.lt.s32.totalorder %v233, 13
  %vm960 = vcmp.lt.s32.totalorder %v234, 13
  %vm961 = vcmp.lt.s32.totalorder %v235, 13
  %vm962 = vcmp.lt.s32.totalorder %v236, 13
  %vm963 = vcmp.lt.s32.totalorder %v237, 13
  %vm964 = vcmp.lt.s32.totalorder %v238, 13
  %vm965 = vcmp.lt.s32.totalorder %v239, 13
  %vm966 = vcmp.lt.s32.totalorder %v240, 13
  %vm967 = vcmp.lt.s32.totalorder %v241, 13
  %vm968 = vcmp.lt.s32.totalorder %v242, 13
  %vm969 = vcmp.lt.s32.totalorder %v243, 13
  %vm970 = vcmp.lt.s32.totalorder %v244, 13
  %vm971 = vcmp.lt.s32.totalorder %v245, 13
  %vm972 = vcmp.lt.s32.totalorder %v246, 13
  %vm973 = vcmp.lt.s32.totalorder %v247, 13
  %vm974 = vmand %vm942, %vm958
  %vm975 = vmand %vm943, %vm959
  %vm976 = vmand %vm944, %vm960
  %vm977 = vmand %vm945, %vm961
  %vm978 = vmand %vm946, %vm962
  %vm979 = vmand %vm947, %vm963
  %vm980 = vmand %vm948, %vm964
  %vm981 = vmand %vm949, %vm965
  %vm982 = vmand %vm950, %vm966
  %vm983 = vmand %vm951, %vm967
  %vm984 = vmand %vm952, %vm968
  %vm985 = vmand %vm953, %vm969
  %vm986 = vmand %vm954, %vm970
  %vm987 = vmand %vm955, %vm971
  %vm988 = vmand %vm956, %vm972
  %vm989 = vmand %vm957, %vm973
  %v990 = vsel %vm974, 1, 0
  %v991 = vsel %vm975, 1, 0
  %v992 = vsel %vm976, 1, 0
  %v993 = vsel %vm977, 1, 0
  %v994 = vsel %vm978, 1, 0
  %v995 = vsel %vm979, 1, 0
  %v996 = vsel %vm980, 1, 0
  %v997 = vsel %vm981, 1, 0
  %v998 = vsel %vm982, 1, 0
  %v999 = vsel %vm983, 1, 0
  %v1000 = vsel %vm984, 1, 0
  %v1001 = vsel %vm985, 1, 0
  %v1002 = vsel %vm986, 1, 0
  %v1003 = vsel %vm987, 1, 0
  %v1004 = vsel %vm988, 1, 0
  %v1005 = vsel %vm989, 1, 0
  %vm1006 = vcmp.eq.s32.totalorder %v990, 1
  %vm1007 = vcmp.eq.s32.totalorder %v991, 1
  %vm1008 = vcmp.eq.s32.totalorder %v992, 1
  %vm1009 = vcmp.eq.s32.totalorder %v993, 1
  %vm1010 = vcmp.eq.s32.totalorder %v994, 1
  %vm1011 = vcmp.eq.s32.totalorder %v995, 1
  %vm1012 = vcmp.eq.s32.totalorder %v996, 1
  %vm1013 = vcmp.eq.s32.totalorder %v997, 1
  %vm1014 = vcmp.eq.s32.totalorder %v998, 1
  %vm1015 = vcmp.eq.s32.totalorder %v999, 1
  %vm1016 = vcmp.eq.s32.totalorder %v1000, 1
  %vm1017 = vcmp.eq.s32.totalorder %v1001, 1
  %vm1018 = vcmp.eq.s32.totalorder %v1002, 1
  %vm1019 = vcmp.eq.s32.totalorder %v1003, 1
  %vm1020 = vcmp.eq.s32.totalorder %v1004, 1
  %vm1021 = vcmp.eq.s32.totalorder %v1005, 1
  %v1022 = vsel %vm1006, %v940, 0.0
  %v1023 = vsel %vm1007, %v939, 0.0
  %v1024 = vsel %vm1008, %v938, 0.0
  %v1025 = vsel %vm1009, %v937, 0.0
  %v1026 = vsel %vm1010, %v936, 0.0
  %v1027 = vsel %vm1011, %v935, 0.0
  %v1028 = vsel %vm1012, %v934, 0.0
  %v1029 = vsel %vm1013, %v933, 0.0
  %v1030 = vsel %vm1014, %v932, 0.0
  %v1031 = vsel %vm1015, %v931, 0.0
  %v1032 = vsel %vm1016, %v930, 0.0
  %v1033 = vsel %vm1017, %v929, 0.0
  %v1034 = vsel %vm1018, %v928, 0.0
  %v1035 = vsel %vm1019, %v927, 0.0
  %v1036 = vsel %vm1020, %v926, 0.0
  %v1037 = vsel %vm1021, %v941, 0.0
  %1054 = vrot.lane.b32.xlu0 %v506, 4
  %v1055 = vpop.permute.xlu0 %1054
  %1056 = vrot.lane.b32.xlu0 %v507, 4
  %v1057 = vpop.permute.xlu0 %1056
  %1058 = vrot.lane.b32.xlu0 %v508, 4
  %v1059 = vpop.permute.xlu0 %1058
  %1060 = vrot.lane.b32.xlu0 %v509, 4
  %v1061 = vpop.permute.xlu0 %1060
  %1062 = vrot.lane.b32.xlu0 %v510, 4
  %v1063 = vpop.permute.xlu0 %1062
  %1064 = vrot.lane.b32.xlu0 %v511, 4
  %v1065 = vpop.permute.xlu0 %1064
  %1066 = vrot.lane.b32.xlu0 %v512, 4
  %v1067 = vpop.permute.xlu0 %1066
  %1068 = vrot.lane.b32.xlu0 %v513, 4
  %v1069 = vpop.permute.xlu0 %1068
  %1070 = vrot.lane.b32.xlu0 %v514, 4
  %v1071 = vpop.permute.xlu0 %1070
  %1072 = vrot.lane.b32.xlu0 %v515, 4
  %v1073 = vpop.permute.xlu0 %1072
  %1074 = vrot.lane.b32.xlu0 %v516, 4
  %v1075 = vpop.permute.xlu0 %1074
  %1076 = vrot.lane.b32.xlu0 %v517, 4
  %v1077 = vpop.permute.xlu0 %1076
  %1078 = vrot.lane.b32.xlu0 %v518, 4
  %v1079 = vpop.permute.xlu0 %1078
  %1080 = vrot.lane.b32.xlu0 %v519, 4
  %v1081 = vpop.permute.xlu0 %1080
  %1082 = vrot.lane.b32.xlu0 %v520, 4
  %v1083 = vpop.permute.xlu0 %1082
  %1084 = vrot.lane.b32.xlu0 %v521, 4
  %v1085 = vpop.permute.xlu0 %1084
  %1118 = vrot.lane.b32.xlu0 %v635, 8
  %v1119 = vpop.permute.xlu0 %1118
  %1120 = vrot.lane.b32.xlu0 %v636, 8
  %v1121 = vpop.permute.xlu0 %1120
  %1122 = vrot.lane.b32.xlu0 %v637, 8
  %v1123 = vpop.permute.xlu0 %1122
  %1124 = vrot.lane.b32.xlu0 %v638, 8
  %v1125 = vpop.permute.xlu0 %1124
  %1126 = vrot.lane.b32.xlu0 %v639, 8
  %v1127 = vpop.permute.xlu0 %1126
  %1128 = vrot.lane.b32.xlu0 %v640, 8
  %v1129 = vpop.permute.xlu0 %1128
  %1130 = vrot.lane.b32.xlu0 %v641, 8
  %v1131 = vpop.permute.xlu0 %1130
  %1132 = vrot.lane.b32.xlu0 %v642, 8
  %v1133 = vpop.permute.xlu0 %1132
  %1134 = vrot.lane.b32.xlu0 %v643, 8
  %v1135 = vpop.permute.xlu0 %1134
  %1136 = vrot.lane.b32.xlu0 %v644, 8
  %v1137 = vpop.permute.xlu0 %1136
  %1138 = vrot.lane.b32.xlu0 %v645, 8
  %v1139 = vpop.permute.xlu0 %1138
  %1140 = vrot.lane.b32.xlu0 %v646, 8
  %v1141 = vpop.permute.xlu0 %1140
  %1142 = vrot.lane.b32.xlu0 %v647, 8
  %v1143 = vpop.permute.xlu0 %1142
  %1144 = vrot.lane.b32.xlu0 %v648, 8
  %v1145 = vpop.permute.xlu0 %1144
  %1146 = vrot.lane.b32.xlu0 %v649, 8
  %v1147 = vpop.permute.xlu0 %1146
  %1148 = vrot.lane.b32.xlu0 %v650, 8
  %v1149 = vpop.permute.xlu0 %1148
  %1182 = vrot.lane.b32.xlu0 %v248, 12
  %v1183 = vpop.permute.xlu0 %1182
  %1184 = vrot.lane.b32.xlu0 %v249, 12
  %v1185 = vpop.permute.xlu0 %1184
  %1186 = vrot.lane.b32.xlu0 %v250, 12
  %v1187 = vpop.permute.xlu0 %1186
  %1188 = vrot.lane.b32.xlu0 %v251, 12
  %v1189 = vpop.permute.xlu0 %1188
  %1190 = vrot.lane.b32.xlu0 %v252, 12
  %v1191 = vpop.permute.xlu0 %1190
  %1192 = vrot.lane.b32.xlu0 %v253, 12
  %v1193 = vpop.permute.xlu0 %1192
  %1194 = vrot.lane.b32.xlu0 %v254, 12
  %v1195 = vpop.permute.xlu0 %1194
  %1196 = vrot.lane.b32.xlu0 %v255, 12
  %v1197 = vpop.permute.xlu0 %1196
  %1198 = vrot.lane.b32.xlu0 %v256, 12
  %v1199 = vpop.permute.xlu0 %1198
  %1200 = vrot.lane.b32.xlu0 %v257, 12
  %v1201 = vpop.permute.xlu0 %1200
  %1202 = vrot.lane.b32.xlu0 %v258, 12
  %v1203 = vpop.permute.xlu0 %1202
  %1204 = vrot.lane.b32.xlu0 %v259, 12
  %v1205 = vpop.permute.xlu0 %1204
  %1206 = vrot.lane.b32.xlu0 %v260, 12
  %v1207 = vpop.permute.xlu0 %1206
  %1208 = vrot.lane.b32.xlu0 %v261, 12
  %v1209 = vpop.permute.xlu0 %1208
  %1210 = vrot.lane.b32.xlu0 %v262, 12
  %v1211 = vpop.permute.xlu0 %1210
  %1212 = vrot.lane.b32.xlu0 %v263, 12
  %v1213 = vpop.permute.xlu0 %1212
  %1246 = vrot.lane.b32.xlu0 %v764, 16
  %v1247 = vpop.permute.xlu0 %1246
  %1248 = vrot.lane.b32.xlu0 %v765, 16
  %v1249 = vpop.permute.xlu0 %1248
  %1250 = vrot.lane.b32.xlu0 %v766, 16
  %v1251 = vpop.permute.xlu0 %1250
  %1252 = vrot.lane.b32.xlu0 %v767, 16
  %v1253 = vpop.permute.xlu0 %1252
  %1254 = vrot.lane.b32.xlu0 %v768, 16
  %v1255 = vpop.permute.xlu0 %1254
  %1256 = vrot.lane.b32.xlu0 %v769, 16
  %v1257 = vpop.permute.xlu0 %1256
  %1258 = vrot.lane.b32.xlu0 %v770, 16
  %v1259 = vpop.permute.xlu0 %1258
  %1260 = vrot.lane.b32.xlu0 %v771, 16
  %v1261 = vpop.permute.xlu0 %1260
  %1262 = vrot.lane.b32.xlu0 %v772, 16
  %v1263 = vpop.permute.xlu0 %1262
  %1264 = vrot.lane.b32.xlu0 %v773, 16
  %v1265 = vpop.permute.xlu0 %1264
  %1266 = vrot.lane.b32.xlu0 %v774, 16
  %v1267 = vpop.permute.xlu0 %1266
  %1268 = vrot.lane.b32.xlu0 %v775, 16
  %v1269 = vpop.permute.xlu0 %1268
  %1270 = vrot.lane.b32.xlu0 %v776, 16
  %v1271 = vpop.permute.xlu0 %1270
  %1272 = vrot.lane.b32.xlu0 %v777, 16
  %v1273 = vpop.permute.xlu0 %1272
  %1274 = vrot.lane.b32.xlu0 %v778, 16
  %v1275 = vpop.permute.xlu0 %1274
  %1276 = vrot.lane.b32.xlu0 %v779, 16
  %v1277 = vpop.permute.xlu0 %1276
  %1310 = vrot.lane.b32.xlu0 %v893, 20
  %v1311 = vpop.permute.xlu0 %1310
  %1312 = vrot.lane.b32.xlu0 %v894, 20
  %v1313 = vpop.permute.xlu0 %1312
  %1314 = vrot.lane.b32.xlu0 %v895, 20
  %v1315 = vpop.permute.xlu0 %1314
  %1316 = vrot.lane.b32.xlu0 %v896, 20
  %v1317 = vpop.permute.xlu0 %1316
  %1318 = vrot.lane.b32.xlu0 %v897, 20
  %v1319 = vpop.permute.xlu0 %1318
  %1320 = vrot.lane.b32.xlu0 %v898, 20
  %v1321 = vpop.permute.xlu0 %1320
  %1322 = vrot.lane.b32.xlu0 %v899, 20
  %v1323 = vpop.permute.xlu0 %1322
  %1324 = vrot.lane.b32.xlu0 %v900, 20
  %v1325 = vpop.permute.xlu0 %1324
  %1326 = vrot.lane.b32.xlu0 %v901, 20
  %v1327 = vpop.permute.xlu0 %1326
  %1328 = vrot.lane.b32.xlu0 %v902, 20
  %v1329 = vpop.permute.xlu0 %1328
  %1330 = vrot.lane.b32.xlu0 %v903, 20
  %v1331 = vpop.permute.xlu0 %1330
  %1332 = vrot.lane.b32.xlu0 %v904, 20
  %v1333 = vpop.permute.xlu0 %1332
  %1334 = vrot.lane.b32.xlu0 %v905, 20
  %v1335 = vpop.permute.xlu0 %1334
  %1336 = vrot.lane.b32.xlu0 %v906, 20
  %v1337 = vpop.permute.xlu0 %1336
  %1338 = vrot.lane.b32.xlu0 %v907, 20
  %v1339 = vpop.permute.xlu0 %1338
  %1340 = vrot.lane.b32.xlu0 %v908, 20
  %v1341 = vpop.permute.xlu0 %1340
  %1374 = vrot.lane.b32.xlu0 %v1022, 24
  %v1375 = vpop.permute.xlu0 %1374
  %1376 = vrot.lane.b32.xlu0 %v1023, 24
  %v1377 = vpop.permute.xlu0 %1376
  %1378 = vrot.lane.b32.xlu0 %v1024, 24
  %v1379 = vpop.permute.xlu0 %1378
  %1380 = vrot.lane.b32.xlu0 %v1025, 24
  %v1381 = vpop.permute.xlu0 %1380
  %1382 = vrot.lane.b32.xlu0 %v1026, 24
  %v1383 = vpop.permute.xlu0 %1382
  %1384 = vrot.lane.b32.xlu0 %v1027, 24
  %v1385 = vpop.permute.xlu0 %1384
  %1386 = vrot.lane.b32.xlu0 %v1028, 24
  %v1387 = vpop.permute.xlu0 %1386
  %1388 = vrot.lane.b32.xlu0 %v1029, 24
  %v1389 = vpop.permute.xlu0 %1388
  %1390 = vrot.lane.b32.xlu0 %v1030, 24
  %v1391 = vpop.permute.xlu0 %1390
  %1392 = vrot.lane.b32.xlu0 %v1031, 24
  %v1393 = vpop.permute.xlu0 %1392
  %1394 = vrot.lane.b32.xlu0 %v1032, 24
  %v1395 = vpop.permute.xlu0 %1394
  %1396 = vrot.lane.b32.xlu0 %v1033, 24
  %v1397 = vpop.permute.xlu0 %1396
  %1398 = vrot.lane.b32.xlu0 %v1034, 24
  %v1399 = vpop.permute.xlu0 %1398
  %1400 = vrot.lane.b32.xlu0 %v1035, 24
  %v1401 = vpop.permute.xlu0 %1400
  %1402 = vrot.lane.b32.xlu0 %v1036, 24
  %v1403 = vpop.permute.xlu0 %1402
  %1404 = vrot.lane.b32.xlu0 %v1037, 24
  %v1405 = vpop.permute.xlu0 %1404
  %vm1422 = vcmask 31744
  %v1423 = vsel %vm1422, %v377, %v1055
  %v1424 = vsel %vm1422, %v378, %v1057
  %v1425 = vsel %vm1422, %v379, %v1059
  %v1426 = vsel %vm1422, %v380, %v1061
  %v1427 = vsel %vm1422, %v381, %v1063
  %v1428 = vsel %vm1422, %v382, %v1065
  %v1429 = vsel %vm1422, %v383, %v1067
  %v1430 = vsel %vm1422, %v384, %v1069
  %v1431 = vsel %vm1422, %v385, %v1071
  %v1432 = vsel %vm1422, %v386, %v1073
  %v1433 = vsel %vm1422, %v387, %v1075
  %v1434 = vsel %vm1422, %v388, %v1077
  %v1435 = vsel %vm1422, %v389, %v1079
  %v1436 = vsel %vm1422, %v390, %v1081
  %v1437 = vsel %vm1422, %v391, %v1083
  %v1438 = vsel %vm1422, %v392, %v1085
  %vm1439 = vcmask 64512
  %v1440 = vsel %vm1439, %v1423, %v1119
  %v1441 = vsel %vm1439, %v1424, %v1121
  %v1442 = vsel %vm1439, %v1425, %v1123
  %v1443 = vsel %vm1439, %v1426, %v1125
  %v1444 = vsel %vm1439, %v1427, %v1127
  %v1445 = vsel %vm1439, %v1428, %v1129
  %v1446 = vsel %vm1439, %v1429, %v1131
  %v1447 = vsel %vm1439, %v1430, %v1133
  %v1448 = vsel %vm1439, %v1431, %v1135
  %v1449 = vsel %vm1439, %v1432, %v1137
  %v1450 = vsel %vm1439, %v1433, %v1139
  %v1451 = vsel %vm1439, %v1434, %v1141
  %v1452 = vsel %vm1439, %v1435, %v1143
  %v1453 = vsel %vm1439, %v1436, %v1145
  %v1454 = vsel %vm1439, %v1437, %v1147
  %v1455 = vsel %vm1439, %v1438, %v1149
  %vm1456 = vcmask 97280
  %v1457 = vsel %vm1456, %v1440, %v1183
  %v1458 = vsel %vm1456, %v1441, %v1185
  %v1459 = vsel %vm1456, %v1442, %v1187
  %v1460 = vsel %vm1456, %v1443, %v1189
  %v1461 = vsel %vm1456, %v1444, %v1191
  %v1462 = vsel %vm1456, %v1445, %v1193
  %v1463 = vsel %vm1456, %v1446, %v1195
  %v1464 = vsel %vm1456, %v1447, %v1197
  %v1465 = vsel %vm1456, %v1448, %v1199
  %v1466 = vsel %vm1456, %v1449, %v1201
  %v1467 = vsel %vm1456, %v1450, %v1203
  %v1468 = vsel %vm1456, %v1451, %v1205
  %v1469 = vsel %vm1456, %v1452, %v1207
  %v1470 = vsel %vm1456, %v1453, %v1209
  %v1471 = vsel %vm1456, %v1454, %v1211
  %v1472 = vsel %vm1456, %v1455, %v1213
  %vm1473 = vcmask 130048
  %v1474 = vsel %vm1473, %v1457, %v1247
  %v1475 = vsel %vm1473, %v1458, %v1249
  %v1476 = vsel %vm1473, %v1459, %v1251
  %v1477 = vsel %vm1473, %v1460, %v1253
  %v1478 = vsel %vm1473, %v1461, %v1255
  %v1479 = vsel %vm1473, %v1462, %v1257
  %v1480 = vsel %vm1473, %v1463, %v1259
  %v1481 = vsel %vm1473, %v1464, %v1261
  %v1482 = vsel %vm1473, %v1465, %v1263
  %v1483 = vsel %vm1473, %v1466, %v1265
  %v1484 = vsel %vm1473, %v1467, %v1267
  %v1485 = vsel %vm1473, %v1468, %v1269
  %v1486 = vsel %vm1473, %v1469, %v1271
  %v1487 = vsel %vm1473, %v1470, %v1273
  %v1488 = vsel %vm1473, %v1471, %v1275
  %v1489 = vsel %vm1473, %v1472, %v1277
  %vm1490 = vcmask 162816
  %v1491 = vsel %vm1490, %v1474, %v1311
  %v1492 = vsel %vm1490, %v1475, %v1313
  %v1493 = vsel %vm1490, %v1476, %v1315
  %v1494 = vsel %vm1490, %v1477, %v1317
  %v1495 = vsel %vm1490, %v1478, %v1319
  %v1496 = vsel %vm1490, %v1479, %v1321
  %v1497 = vsel %vm1490, %v1480, %v1323
  %v1498 = vsel %vm1490, %v1481, %v1325
  %v1499 = vsel %vm1490, %v1482, %v1327
  %v1500 = vsel %vm1490, %v1483, %v1329
  %v1501 = vsel %vm1490, %v1484, %v1331
  %v1502 = vsel %vm1490, %v1485, %v1333
  %v1503 = vsel %vm1490, %v1486, %v1335
  %v1504 = vsel %vm1490, %v1487, %v1337
  %v1505 = vsel %vm1490, %v1488, %v1339
  %v1506 = vsel %vm1490, %v1489, %v1341
  %vm1507 = vcmask 195584
  %v1508 = vsel %vm1507, %v1491, %v1375
  %v1509 = vsel %vm1507, %v1492, %v1377
  %v1510 = vsel %vm1507, %v1493, %v1379
  %v1511 = vsel %vm1507, %v1494, %v1381
  %v1512 = vsel %vm1507, %v1495, %v1383
  %v1513 = vsel %vm1507, %v1496, %v1385
  %v1514 = vsel %vm1507, %v1497, %v1387
  %v1515 = vsel %vm1507, %v1498, %v1389
  %v1516 = vsel %vm1507, %v1499, %v1391
  %v1517 = vsel %vm1507, %v1500, %v1393
  %v1518 = vsel %vm1507, %v1501, %v1395
  %v1519 = vsel %vm1507, %v1502, %v1397
  %v1520 = vsel %vm1507, %v1503, %v1399
  %v1521 = vsel %vm1507, %v1504, %v1401
  %v1522 = vsel %vm1507, %v1505, %v1403
  %v1523 = vsel %vm1507, %v1506, %v1405
  %v1524 = vpack.c.bf16 %v1509, %v1508
  %v1525 = vpack.c.bf16 %v1511, %v1510
  %v1526 = vpack.c.bf16 %v1513, %v1512
  %v1527 = vpack.c.bf16 %v1515, %v1514
  %v1528 = vpack.c.bf16 %v1517, %v1516
  %v1529 = vpack.c.bf16 %v1519, %v1518
  %v1530 = vpack.c.bf16 %v1521, %v1520
  %v1531 = vpack.c.bf16 %v1523, %v1522
  %v1532 = vld [vmem:[%s1] sm:$0xf]
  %v1533 = vld [vmem:[%s1 + $0x4] sm:$0xf]
  %v1534 = vld [vmem:[%s1 + $0x8] sm:$0xf]
  %v1535 = vld [vmem:[%s1 + $0xc] sm:$0x3]
  %v1536 = vld [vmem:[%s2] sm:$0x1]
  %v1538 = vperm.slane %v1536, 0
  %v1544 = vunpack.c.l.b16 %v1532
  %v1545 = vunpack.c.l.b16 %v1533
  %v1546 = vunpack.c.l.b16 %v1534
  %v1547 = vunpack.c.l.b16 %v1535
  %v1548 = vpack.c.b16 %v1545, %v1544
  %v1549 = vpack.c.b16 %v1547, %v1546
  %vm1551 = vcmask 228352
  %v1553 = vsel %vm1551, %v1524, 0
  %v1556 = vsel %vm1551, %v1525, 0
  %v1559 = vsel %vm1551, %v1526, 0
  %v1562 = vsel %vm1551, %v1527, 0
  %v1565 = vsel %vm1551, %v1528, 0
  %v1568 = vsel %vm1551, %v1529, 0
  %v1571 = vsel %vm1551, %v1530, 0
  %v1574 = vsel %vm1551, %v1531, 0
  %vm1576 = vcmask 1045504
  %v1578 = vsel %vm1576, %v1549, 0
  %1580 = vmatpush.bf16.msra.mxu0 0
  %1581 = vmatpush.bf16.msra.mxu0 0
  %1582 = vmatpush.bf16.msra.mxu0 0
  %1583 = vmatpush.bf16.msra.mxu0 0
  %1584 = vmatpush.bf16.msra.mxu0 0
  %1585 = vmatpush.bf16.msra.mxu0 0
  %1586 = vmatpush.bf16.msra.mxu0 %v1578
  %1587 = vmatpush.bf16.msra.mxu0 %v1548
  %1588 = vmatmul.bf16.gmra.mxu0 %v1553
  %v1589 = vpop.f32.mrf.mxu0
  %v1590 = vadd.f32 %v1538, %v1589
  %v1591 = vpop.f32.mrf.mxu0
  %v1592 = vadd.f32 %v1538, %v1591
  %1593 = vmatmul.bf16.gmra.mxu0 %v1556
  %v1594 = vpop.f32.mrf.mxu0
  %v1595 = vadd.f32 %v1538, %v1594
  %v1596 = vpop.f32.mrf.mxu0
  %v1597 = vadd.f32 %v1538, %v1596
  %1598 = vmatmul.bf16.gmra.mxu0 %v1559
  %v1599 = vpop.f32.mrf.mxu0
  %v1600 = vadd.f32 %v1538, %v1599
  %v1601 = vpop.f32.mrf.mxu0
  %v1602 = vadd.f32 %v1538, %v1601
  %1603 = vmatmul.bf16.gmra.mxu0 %v1562
  %v1604 = vpop.f32.mrf.mxu0
  %v1605 = vadd.f32 %v1538, %v1604
  %v1606 = vpop.f32.mrf.mxu0
  %v1607 = vadd.f32 %v1538, %v1606
  %1608 = vmatmul.bf16.gmra.mxu0 %v1565
  %v1609 = vpop.f32.mrf.mxu0
  %v1610 = vadd.f32 %v1538, %v1609
  %v1611 = vpop.f32.mrf.mxu0
  %v1612 = vadd.f32 %v1538, %v1611
  %1613 = vmatmul.bf16.gmra.mxu0 %v1568
  %v1614 = vpop.f32.mrf.mxu0
  %v1615 = vadd.f32 %v1538, %v1614
  %v1616 = vpop.f32.mrf.mxu0
  %v1617 = vadd.f32 %v1538, %v1616
  %1618 = vmatmul.bf16.gmra.mxu0 %v1571
  %v1619 = vpop.f32.mrf.mxu0
  %v1620 = vadd.f32 %v1538, %v1619
  %v1621 = vpop.f32.mrf.mxu0
  %v1622 = vadd.f32 %v1538, %v1621
  %1623 = vmatmul.bf16.gmra.mxu0 %v1574
  %v1624 = vpop.f32.mrf.mxu0
  %v1625 = vadd.f32 %v1538, %v1624
  %v1626 = vpop.f32.mrf.mxu0
  %v1627 = vadd.f32 %v1538, %v1626
  %1628 = vdwg.mxu0
  %v1629 = vmax.f32 %v1590, 0.0
  %v1630 = vmax.f32 %v1592, 0.0
  %v1631 = vmax.f32 %v1595, 0.0
  %v1632 = vmax.f32 %v1597, 0.0
  %v1633 = vmax.f32 %v1600, 0.0
  %v1634 = vmax.f32 %v1602, 0.0
  %v1635 = vmax.f32 %v1605, 0.0
  %v1636 = vmax.f32 %v1607, 0.0
  %v1637 = vmax.f32 %v1610, 0.0
  %v1638 = vmax.f32 %v1612, 0.0
  %v1639 = vmax.f32 %v1615, 0.0
  %v1640 = vmax.f32 %v1617, 0.0
  %v1641 = vmax.f32 %v1620, 0.0
  %v1642 = vmax.f32 %v1622, 0.0
  %v1643 = vmax.f32 %v1625, 0.0
  %v1644 = vmax.f32 %v1627, 0.0
  %v1645 = vrot.slane %v1629, 6
  %v1646 = vrot.slane %v1630, 6
  %v1647 = vrot.slane %v1631, 6
  %v1648 = vrot.slane %v1632, 6
  %v1649 = vrot.slane %v1633, 6
  %v1650 = vrot.slane %v1634, 6
  %v1651 = vrot.slane %v1635, 6
  %v1652 = vrot.slane %v1636, 6
  %v1653 = vrot.slane %v1637, 6
  %v1654 = vrot.slane %v1638, 6
  %v1655 = vrot.slane %v1639, 6
  %v1656 = vrot.slane %v1640, 6
  %v1657 = vrot.slane %v1641, 6
  %v1658 = vrot.slane %v1642, 6
  %v1659 = vrot.slane %v1643, 6
  %v1660 = vrot.slane %v1644, 6
  %v1661 = vsel %vm409, %v1659, %v1660
  %v1662 = vsel %vm409, %v1658, %v1659
  %v1663 = vsel %vm409, %v1657, %v1658
  %v1664 = vsel %vm409, %v1656, %v1657
  %v1665 = vsel %vm409, %v1655, %v1656
  %v1666 = vsel %vm409, %v1654, %v1655
  %v1667 = vsel %vm409, %v1653, %v1654
  %v1668 = vsel %vm409, %v1652, %v1653
  %v1669 = vsel %vm409, %v1651, %v1652
  %v1670 = vsel %vm409, %v1650, %v1651
  %v1671 = vsel %vm409, %v1649, %v1650
  %v1672 = vsel %vm409, %v1648, %v1649
  %v1673 = vsel %vm409, %v1647, %v1648
  %v1674 = vsel %vm409, %v1646, %v1647
  %v1675 = vsel %vm409, %v1645, %v1646
  %v1676 = vsel %vm409, %v1660, %v1645
  %v1677 = vsel %vm490, %v1676, 0.0
  %v1678 = vsel %vm491, %v1675, 0.0
  %v1679 = vsel %vm492, %v1674, 0.0
  %v1680 = vsel %vm493, %v1673, 0.0
  %v1681 = vsel %vm494, %v1672, 0.0
  %v1682 = vsel %vm495, %v1671, 0.0
  %v1683 = vsel %vm496, %v1670, 0.0
  %v1684 = vsel %vm497, %v1669, 0.0
  %v1685 = vsel %vm498, %v1668, 0.0
  %v1686 = vsel %vm499, %v1667, 0.0
  %v1687 = vsel %vm500, %v1666, 0.0
  %v1688 = vsel %vm501, %v1665, 0.0
  %v1689 = vsel %vm502, %v1664, 0.0
  %v1690 = vsel %vm503, %v1663, 0.0
  %v1691 = vsel %vm504, %v1662, 0.0
  %v1692 = vsel %vm505, %v1661, 0.0
  %v1693 = vrot.slane %v1629, 7
  %v1694 = vrot.slane %v1630, 7
  %v1695 = vrot.slane %v1631, 7
  %v1696 = vrot.slane %v1632, 7
  %v1697 = vrot.slane %v1633, 7
  %v1698 = vrot.slane %v1634, 7
  %v1699 = vrot.slane %v1635, 7
  %v1700 = vrot.slane %v1636, 7
  %v1701 = vrot.slane %v1637, 7
  %v1702 = vrot.slane %v1638, 7
  %v1703 = vrot.slane %v1639, 7
  %v1704 = vrot.slane %v1640, 7
  %v1705 = vrot.slane %v1641, 7
  %v1706 = vrot.slane %v1642, 7
  %v1707 = vrot.slane %v1643, 7
  %v1708 = vrot.slane %v1644, 7
  %v1709 = vsel %vm538, %v1707, %v1708
  %v1710 = vsel %vm538, %v1706, %v1707
  %v1711 = vsel %vm538, %v1705, %v1706
  %v1712 = vsel %vm538, %v1704, %v1705
  %v1713 = vsel %vm538, %v1703, %v1704
  %v1714 = vsel %vm538, %v1702, %v1703
  %v1715 = vsel %vm538, %v1701, %v1702
  %v1716 = vsel %vm538, %v1700, %v1701
  %v1717 = vsel %vm538, %v1699, %v1700
  %v1718 = vsel %vm538, %v1698, %v1699
  %v1719 = vsel %vm538, %v1697, %v1698
  %v1720 = vsel %vm538, %v1696, %v1697
  %v1721 = vsel %vm538, %v1695, %v1696
  %v1722 = vsel %vm538, %v1694, %v1695
  %v1723 = vsel %vm538, %v1693, %v1694
  %v1724 = vsel %vm538, %v1708, %v1693
  %v1725 = vsel %vm619, %v1724, 0.0
  %v1726 = vsel %vm620, %v1723, 0.0
  %v1727 = vsel %vm621, %v1722, 0.0
  %v1728 = vsel %vm622, %v1721, 0.0
  %v1729 = vsel %vm623, %v1720, 0.0
  %v1730 = vsel %vm624, %v1719, 0.0
  %v1731 = vsel %vm625, %v1718, 0.0
  %v1732 = vsel %vm626, %v1717, 0.0
  %v1733 = vsel %vm627, %v1716, 0.0
  %v1734 = vsel %vm628, %v1715, 0.0
  %v1735 = vsel %vm629, %v1714, 0.0
  %v1736 = vsel %vm630, %v1713, 0.0
  %v1737 = vsel %vm631, %v1712, 0.0
  %v1738 = vsel %vm632, %v1711, 0.0
  %v1739 = vsel %vm633, %v1710, 0.0
  %v1740 = vsel %vm634, %v1709, 0.0
  %v1741 = vrot.slane %v1629, 1
  %v1742 = vrot.slane %v1630, 1
  %v1743 = vrot.slane %v1631, 1
  %v1744 = vrot.slane %v1632, 1
  %v1745 = vrot.slane %v1633, 1
  %v1746 = vrot.slane %v1634, 1
  %v1747 = vrot.slane %v1635, 1
  %v1748 = vrot.slane %v1636, 1
  %v1749 = vrot.slane %v1637, 1
  %v1750 = vrot.slane %v1638, 1
  %v1751 = vrot.slane %v1639, 1
  %v1752 = vrot.slane %v1640, 1
  %v1753 = vrot.slane %v1641, 1
  %v1754 = vrot.slane %v1642, 1
  %v1755 = vrot.slane %v1643, 1
  %v1756 = vrot.slane %v1644, 1
  %v1757 = vsel %vm667, %v1755, %v1756
  %v1758 = vsel %vm667, %v1754, %v1755
  %v1759 = vsel %vm667, %v1753, %v1754
  %v1760 = vsel %vm667, %v1752, %v1753
  %v1761 = vsel %vm667, %v1751, %v1752
  %v1762 = vsel %vm667, %v1750, %v1751
  %v1763 = vsel %vm667, %v1749, %v1750
  %v1764 = vsel %vm667, %v1748, %v1749
  %v1765 = vsel %vm667, %v1747, %v1748
  %v1766 = vsel %vm667, %v1746, %v1747
  %v1767 = vsel %vm667, %v1745, %v1746
  %v1768 = vsel %vm667, %v1744, %v1745
  %v1769 = vsel %vm667, %v1743, %v1744
  %v1770 = vsel %vm667, %v1742, %v1743
  %v1771 = vsel %vm667, %v1741, %v1742
  %v1772 = vsel %vm667, %v1756, %v1741
  %v1773 = vsel %vm748, %v1771, 0.0
  %v1774 = vsel %vm749, %v1770, 0.0
  %v1775 = vsel %vm750, %v1769, 0.0
  %v1776 = vsel %vm751, %v1768, 0.0
  %v1777 = vsel %vm752, %v1767, 0.0
  %v1778 = vsel %vm753, %v1766, 0.0
  %v1779 = vsel %vm754, %v1765, 0.0
  %v1780 = vsel %vm755, %v1764, 0.0
  %v1781 = vsel %vm756, %v1763, 0.0
  %v1782 = vsel %vm757, %v1762, 0.0
  %v1783 = vsel %vm758, %v1761, 0.0
  %v1784 = vsel %vm759, %v1760, 0.0
  %v1785 = vsel %vm760, %v1759, 0.0
  %v1786 = vsel %vm761, %v1758, 0.0
  %v1787 = vsel %vm762, %v1757, 0.0
  %v1788 = vsel %vm763, %v1772, 0.0
  %v1789 = vrot.slane %v1629, 2
  %v1790 = vrot.slane %v1630, 2
  %v1791 = vrot.slane %v1631, 2
  %v1792 = vrot.slane %v1632, 2
  %v1793 = vrot.slane %v1633, 2
  %v1794 = vrot.slane %v1634, 2
  %v1795 = vrot.slane %v1635, 2
  %v1796 = vrot.slane %v1636, 2
  %v1797 = vrot.slane %v1637, 2
  %v1798 = vrot.slane %v1638, 2
  %v1799 = vrot.slane %v1639, 2
  %v1800 = vrot.slane %v1640, 2
  %v1801 = vrot.slane %v1641, 2
  %v1802 = vrot.slane %v1642, 2
  %v1803 = vrot.slane %v1643, 2
  %v1804 = vrot.slane %v1644, 2
  %v1805 = vsel %vm796, %v1803, %v1804
  %v1806 = vsel %vm796, %v1802, %v1803
  %v1807 = vsel %vm796, %v1801, %v1802
  %v1808 = vsel %vm796, %v1800, %v1801
  %v1809 = vsel %vm796, %v1799, %v1800
  %v1810 = vsel %vm796, %v1798, %v1799
  %v1811 = vsel %vm796, %v1797, %v1798
  %v1812 = vsel %vm796, %v1796, %v1797
  %v1813 = vsel %vm796, %v1795, %v1796
  %v1814 = vsel %vm796, %v1794, %v1795
  %v1815 = vsel %vm796, %v1793, %v1794
  %v1816 = vsel %vm796, %v1792, %v1793
  %v1817 = vsel %vm796, %v1791, %v1792
  %v1818 = vsel %vm796, %v1790, %v1791
  %v1819 = vsel %vm796, %v1789, %v1790
  %v1820 = vsel %vm796, %v1804, %v1789
  %v1821 = vsel %vm877, %v1819, 0.0
  %v1822 = vsel %vm878, %v1818, 0.0
  %v1823 = vsel %vm879, %v1817, 0.0
  %v1824 = vsel %vm880, %v1816, 0.0
  %v1825 = vsel %vm881, %v1815, 0.0
  %v1826 = vsel %vm882, %v1814, 0.0
  %v1827 = vsel %vm883, %v1813, 0.0
  %v1828 = vsel %vm884, %v1812, 0.0
  %v1829 = vsel %vm885, %v1811, 0.0
  %v1830 = vsel %vm886, %v1810, 0.0
  %v1831 = vsel %vm887, %v1809, 0.0
  %v1832 = vsel %vm888, %v1808, 0.0
  %v1833 = vsel %vm889, %v1807, 0.0
  %v1834 = vsel %vm890, %v1806, 0.0
  %v1835 = vsel %vm891, %v1805, 0.0
  %v1836 = vsel %vm892, %v1820, 0.0
  %1853 = vrot.lane.b32.xlu0 %v1725, 8
  %v1854 = vpop.permute.xlu0 %1853
  %1855 = vrot.lane.b32.xlu0 %v1726, 8
  %v1856 = vpop.permute.xlu0 %1855
  %1857 = vrot.lane.b32.xlu0 %v1727, 8
  %v1858 = vpop.permute.xlu0 %1857
  %1859 = vrot.lane.b32.xlu0 %v1728, 8
  %v1860 = vpop.permute.xlu0 %1859
  %1861 = vrot.lane.b32.xlu0 %v1729, 8
  %v1862 = vpop.permute.xlu0 %1861
  %1863 = vrot.lane.b32.xlu0 %v1730, 8
  %v1864 = vpop.permute.xlu0 %1863
  %1865 = vrot.lane.b32.xlu0 %v1731, 8
  %v1866 = vpop.permute.xlu0 %1865
  %1867 = vrot.lane.b32.xlu0 %v1732, 8
  %v1868 = vpop.permute.xlu0 %1867
  %1869 = vrot.lane.b32.xlu0 %v1733, 8
  %v1870 = vpop.permute.xlu0 %1869
  %1871 = vrot.lane.b32.xlu0 %v1734, 8
  %v1872 = vpop.permute.xlu0 %1871
  %1873 = vrot.lane.b32.xlu0 %v1735, 8
  %v1874 = vpop.permute.xlu0 %1873
  %1875 = vrot.lane.b32.xlu0 %v1736, 8
  %v1876 = vpop.permute.xlu0 %1875
  %1877 = vrot.lane.b32.xlu0 %v1737, 8
  %v1878 = vpop.permute.xlu0 %1877
  %1879 = vrot.lane.b32.xlu0 %v1738, 8
  %v1880 = vpop.permute.xlu0 %1879
  %1881 = vrot.lane.b32.xlu0 %v1739, 8
  %v1882 = vpop.permute.xlu0 %1881
  %1883 = vrot.lane.b32.xlu0 %v1740, 8
  %v1884 = vpop.permute.xlu0 %1883
  %1917 = vrot.lane.b32.xlu0 %v1629, 16
  %v1918 = vpop.permute.xlu0 %1917
  %1919 = vrot.lane.b32.xlu0 %v1630, 16
  %v1920 = vpop.permute.xlu0 %1919
  %1921 = vrot.lane.b32.xlu0 %v1631, 16
  %v1922 = vpop.permute.xlu0 %1921
  %1923 = vrot.lane.b32.xlu0 %v1632, 16
  %v1924 = vpop.permute.xlu0 %1923
  %1925 = vrot.lane.b32.xlu0 %v1633, 16
  %v1926 = vpop.permute.xlu0 %1925
  %1927 = vrot.lane.b32.xlu0 %v1634, 16
  %v1928 = vpop.permute.xlu0 %1927
  %1929 = vrot.lane.b32.xlu0 %v1635, 16
  %v1930 = vpop.permute.xlu0 %1929
  %1931 = vrot.lane.b32.xlu0 %v1636, 16
  %v1932 = vpop.permute.xlu0 %1931
  %1933 = vrot.lane.b32.xlu0 %v1637, 16
  %v1934 = vpop.permute.xlu0 %1933
  %1935 = vrot.lane.b32.xlu0 %v1638, 16
  %v1936 = vpop.permute.xlu0 %1935
  %1937 = vrot.lane.b32.xlu0 %v1639, 16
  %v1938 = vpop.permute.xlu0 %1937
  %1939 = vrot.lane.b32.xlu0 %v1640, 16
  %v1940 = vpop.permute.xlu0 %1939
  %1941 = vrot.lane.b32.xlu0 %v1641, 16
  %v1942 = vpop.permute.xlu0 %1941
  %1943 = vrot.lane.b32.xlu0 %v1642, 16
  %v1944 = vpop.permute.xlu0 %1943
  %1945 = vrot.lane.b32.xlu0 %v1643, 16
  %v1946 = vpop.permute.xlu0 %1945
  %1947 = vrot.lane.b32.xlu0 %v1644, 16
  %v1948 = vpop.permute.xlu0 %1947
  %1981 = vrot.lane.b32.xlu0 %v1773, 24
  %v1982 = vpop.permute.xlu0 %1981
  %1983 = vrot.lane.b32.xlu0 %v1774, 24
  %v1984 = vpop.permute.xlu0 %1983
  %1985 = vrot.lane.b32.xlu0 %v1775, 24
  %v1986 = vpop.permute.xlu0 %1985
  %1987 = vrot.lane.b32.xlu0 %v1776, 24
  %v1988 = vpop.permute.xlu0 %1987
  %1989 = vrot.lane.b32.xlu0 %v1777, 24
  %v1990 = vpop.permute.xlu0 %1989
  %1991 = vrot.lane.b32.xlu0 %v1778, 24
  %v1992 = vpop.permute.xlu0 %1991
  %1993 = vrot.lane.b32.xlu0 %v1779, 24
  %v1994 = vpop.permute.xlu0 %1993
  %1995 = vrot.lane.b32.xlu0 %v1780, 24
  %v1996 = vpop.permute.xlu0 %1995
  %1997 = vrot.lane.b32.xlu0 %v1781, 24
  %v1998 = vpop.permute.xlu0 %1997
  %1999 = vrot.lane.b32.xlu0 %v1782, 24
  %v2000 = vpop.permute.xlu0 %1999
  %2001 = vrot.lane.b32.xlu0 %v1783, 24
  %v2002 = vpop.permute.xlu0 %2001
  %2003 = vrot.lane.b32.xlu0 %v1784, 24
  %v2004 = vpop.permute.xlu0 %2003
  %2005 = vrot.lane.b32.xlu0 %v1785, 24
  %v2006 = vpop.permute.xlu0 %2005
  %2007 = vrot.lane.b32.xlu0 %v1786, 24
  %v2008 = vpop.permute.xlu0 %2007
  %2009 = vrot.lane.b32.xlu0 %v1787, 24
  %v2010 = vpop.permute.xlu0 %2009
  %2011 = vrot.lane.b32.xlu0 %v1788, 24
  %v2012 = vpop.permute.xlu0 %2011
  %2045 = vrot.lane.b32.xlu0 %v1821, 32
  %v2046 = vpop.permute.xlu0 %2045
  %2047 = vrot.lane.b32.xlu0 %v1822, 32
  %v2048 = vpop.permute.xlu0 %2047
  %2049 = vrot.lane.b32.xlu0 %v1823, 32
  %v2050 = vpop.permute.xlu0 %2049
  %2051 = vrot.lane.b32.xlu0 %v1824, 32
  %v2052 = vpop.permute.xlu0 %2051
  %2053 = vrot.lane.b32.xlu0 %v1825, 32
  %v2054 = vpop.permute.xlu0 %2053
  %2055 = vrot.lane.b32.xlu0 %v1826, 32
  %v2056 = vpop.permute.xlu0 %2055
  %2057 = vrot.lane.b32.xlu0 %v1827, 32
  %v2058 = vpop.permute.xlu0 %2057
  %2059 = vrot.lane.b32.xlu0 %v1828, 32
  %v2060 = vpop.permute.xlu0 %2059
  %2061 = vrot.lane.b32.xlu0 %v1829, 32
  %v2062 = vpop.permute.xlu0 %2061
  %2063 = vrot.lane.b32.xlu0 %v1830, 32
  %v2064 = vpop.permute.xlu0 %2063
  %2065 = vrot.lane.b32.xlu0 %v1831, 32
  %v2066 = vpop.permute.xlu0 %2065
  %2067 = vrot.lane.b32.xlu0 %v1832, 32
  %v2068 = vpop.permute.xlu0 %2067
  %2069 = vrot.lane.b32.xlu0 %v1833, 32
  %v2070 = vpop.permute.xlu0 %2069
  %2071 = vrot.lane.b32.xlu0 %v1834, 32
  %v2072 = vpop.permute.xlu0 %2071
  %2073 = vrot.lane.b32.xlu0 %v1835, 32
  %v2074 = vpop.permute.xlu0 %2073
  %2075 = vrot.lane.b32.xlu0 %v1836, 32
  %v2076 = vpop.permute.xlu0 %2075
  %v2093 = vsel %vm1439, %v1677, %v1854
  %v2094 = vsel %vm1439, %v1678, %v1856
  %v2095 = vsel %vm1439, %v1679, %v1858
  %v2096 = vsel %vm1439, %v1680, %v1860
  %v2097 = vsel %vm1439, %v1681, %v1862
  %v2098 = vsel %vm1439, %v1682, %v1864
  %v2099 = vsel %vm1439, %v1683, %v1866
  %v2100 = vsel %vm1439, %v1684, %v1868
  %v2101 = vsel %vm1439, %v1685, %v1870
  %v2102 = vsel %vm1439, %v1686, %v1872
  %v2103 = vsel %vm1439, %v1687, %v1874
  %v2104 = vsel %vm1439, %v1688, %v1876
  %v2105 = vsel %vm1439, %v1689, %v1878
  %v2106 = vsel %vm1439, %v1690, %v1880
  %v2107 = vsel %vm1439, %v1691, %v1882
  %v2108 = vsel %vm1439, %v1692, %v1884
  %v2109 = vsel %vm1473, %v2093, %v1918
  %v2110 = vsel %vm1473, %v2094, %v1920
  %v2111 = vsel %vm1473, %v2095, %v1922
  %v2112 = vsel %vm1473, %v2096, %v1924
  %v2113 = vsel %vm1473, %v2097, %v1926
  %v2114 = vsel %vm1473, %v2098, %v1928
  %v2115 = vsel %vm1473, %v2099, %v1930
  %v2116 = vsel %vm1473, %v2100, %v1932
  %v2117 = vsel %vm1473, %v2101, %v1934
  %v2118 = vsel %vm1473, %v2102, %v1936
  %v2119 = vsel %vm1473, %v2103, %v1938
  %v2120 = vsel %vm1473, %v2104, %v1940
  %v2121 = vsel %vm1473, %v2105, %v1942
  %v2122 = vsel %vm1473, %v2106, %v1944
  %v2123 = vsel %vm1473, %v2107, %v1946
  %v2124 = vsel %vm1473, %v2108, %v1948
  %v2125 = vsel %vm1507, %v2109, %v1982
  %v2126 = vsel %vm1507, %v2110, %v1984
  %v2127 = vsel %vm1507, %v2111, %v1986
  %v2128 = vsel %vm1507, %v2112, %v1988
  %v2129 = vsel %vm1507, %v2113, %v1990
  %v2130 = vsel %vm1507, %v2114, %v1992
  %v2131 = vsel %vm1507, %v2115, %v1994
  %v2132 = vsel %vm1507, %v2116, %v1996
  %v2133 = vsel %vm1507, %v2117, %v1998
  %v2134 = vsel %vm1507, %v2118, %v2000
  %v2135 = vsel %vm1507, %v2119, %v2002
  %v2136 = vsel %vm1507, %v2120, %v2004
  %v2137 = vsel %vm1507, %v2121, %v2006
  %v2138 = vsel %vm1507, %v2122, %v2008
  %v2139 = vsel %vm1507, %v2123, %v2010
  %v2140 = vsel %vm1507, %v2124, %v2012
  %vm2141 = vcmask 261120
  %v2142 = vsel %vm2141, %v2125, %v2046
  %v2143 = vsel %vm2141, %v2126, %v2048
  %v2144 = vsel %vm2141, %v2127, %v2050
  %v2145 = vsel %vm2141, %v2128, %v2052
  %v2146 = vsel %vm2141, %v2129, %v2054
  %v2147 = vsel %vm2141, %v2130, %v2056
  %v2148 = vsel %vm2141, %v2131, %v2058
  %v2149 = vsel %vm2141, %v2132, %v2060
  %v2150 = vsel %vm2141, %v2133, %v2062
  %v2151 = vsel %vm2141, %v2134, %v2064
  %v2152 = vsel %vm2141, %v2135, %v2066
  %v2153 = vsel %vm2141, %v2136, %v2068
  %v2154 = vsel %vm2141, %v2137, %v2070
  %v2155 = vsel %vm2141, %v2138, %v2072
  %v2156 = vsel %vm2141, %v2139, %v2074
  %v2157 = vsel %vm2141, %v2140, %v2076
  %v2158 = vpack.c.bf16 %v2143, %v2142
  %v2159 = vpack.c.bf16 %v2145, %v2144
  %v2160 = vpack.c.bf16 %v2147, %v2146
  %v2161 = vpack.c.bf16 %v2149, %v2148
  %v2162 = vpack.c.bf16 %v2151, %v2150
  %v2163 = vpack.c.bf16 %v2153, %v2152
  %v2164 = vpack.c.bf16 %v2155, %v2154
  %v2165 = vpack.c.bf16 %v2157, %v2156
  %v2166 = vld [vmem:[%s3] sm:$0xf]
  %v2167 = vld [vmem:[%s3 + $0x4] sm:$0xf]
  %v2168 = vld [vmem:[%s3 + $0x8] sm:$0xf]
  %v2169 = vld [vmem:[%s3 + $0xc] sm:$0xf]
  %v2170 = vld [vmem:[%s3 + $0x10] sm:$0xf]
  %v2171 = vld [vmem:[%s4] sm:$0x1]
  %v2173 = vperm.slane %v2171, 0
  %v2180 = vunpack.c.l.b16 %v2166
  %v2181 = vunpack.c.l.b16 %v2167
  %v2182 = vunpack.c.l.b16 %v2168
  %v2183 = vunpack.c.l.b16 %v2169
  %v2184 = vunpack.c.l.b16 %v2170
  %v2185 = vpack.c.b16 %v2181, %v2180
  %v2186 = vpack.c.b16 %v2183, %v2182
  %v2187 = vpack.c.b16 %v2184, %v2184
  %vm2190 = vcmask 326656
  %v2192 = vsel %vm2190, %v2158, 0
  %v2195 = vsel %vm2190, %v2159, 0
  %v2198 = vsel %vm2190, %v2160, 0
  %v2201 = vsel %vm2190, %v2161, 0
  %v2204 = vsel %vm2190, %v2162, 0
  %v2207 = vsel %vm2190, %v2163, 0
  %v2210 = vsel %vm2190, %v2164, 0
  %v2213 = vsel %vm2190, %v2165, 0
  %vm2215 = vcmask 1043456
  %v2217 = vsel %vm2215, %v2187, 0
  %2219 = vmatpush.bf16.msra.mxu0 0
  %2220 = vmatpush.bf16.msra.mxu0 0
  %2221 = vmatpush.bf16.msra.mxu0 0
  %2222 = vmatpush.bf16.msra.mxu0 0
  %2223 = vmatpush.bf16.msra.mxu0 0
  %2224 = vmatpush.bf16.msra.mxu0 %v2217
  %2225 = vmatpush.bf16.msra.mxu0 %v2186
  %2226 = vmatpush.bf16.msra.mxu0 %v2185
  %2227 = vmatmul.bf16.gmra.mxu0 %v2192
  %v2228 = vpop.f32.mrf.mxu0
  %v2229 = vadd.f32 %v2173, %v2228
  %v2230 = vpop.f32.mrf.mxu0
  %v2231 = vadd.f32 %v2173, %v2230
  %2232 = vmatmul.bf16.gmra.mxu0 %v2195
  %v2233 = vpop.f32.mrf.mxu0
  %v2234 = vadd.f32 %v2173, %v2233
  %v2235 = vpop.f32.mrf.mxu0
  %v2236 = vadd.f32 %v2173, %v2235
  %2237 = vmatmul.bf16.gmra.mxu0 %v2198
  %v2238 = vpop.f32.mrf.mxu0
  %v2239 = vadd.f32 %v2173, %v2238
  %v2240 = vpop.f32.mrf.mxu0
  %v2241 = vadd.f32 %v2173, %v2240
  %2242 = vmatmul.bf16.gmra.mxu0 %v2201
  %v2243 = vpop.f32.mrf.mxu0
  %v2244 = vadd.f32 %v2173, %v2243
  %v2245 = vpop.f32.mrf.mxu0
  %v2246 = vadd.f32 %v2173, %v2245
  %2247 = vmatmul.bf16.gmra.mxu0 %v2204
  %v2248 = vpop.f32.mrf.mxu0
  %v2249 = vadd.f32 %v2173, %v2248
  %v2250 = vpop.f32.mrf.mxu0
  %v2251 = vadd.f32 %v2173, %v2250
  %2252 = vmatmul.bf16.gmra.mxu0 %v2207
  %v2253 = vpop.f32.mrf.mxu0
  %v2254 = vadd.f32 %v2173, %v2253
  %v2255 = vpop.f32.mrf.mxu0
  %v2256 = vadd.f32 %v2173, %v2255
  %2257 = vmatmul.bf16.gmra.mxu0 %v2210
  %v2258 = vpop.f32.mrf.mxu0
  %v2259 = vadd.f32 %v2173, %v2258
  %v2260 = vpop.f32.mrf.mxu0
  %v2261 = vadd.f32 %v2173, %v2260
  %2262 = vmatmul.bf16.gmra.mxu0 %v2213
  %v2263 = vpop.f32.mrf.mxu0
  %v2264 = vadd.f32 %v2173, %v2263
  %v2265 = vpop.f32.mrf.mxu0
  %v2266 = vadd.f32 %v2173, %v2265
  %2267 = vdwg.mxu0
  %v2268 = vmax.f32 %v2229, 0.0
  %v2269 = vmax.f32 %v2231, 0.0
  %v2270 = vmax.f32 %v2234, 0.0
  %v2271 = vmax.f32 %v2236, 0.0
  %v2272 = vmax.f32 %v2239, 0.0
  %v2273 = vmax.f32 %v2241, 0.0
  %v2274 = vmax.f32 %v2244, 0.0
  %v2275 = vmax.f32 %v2246, 0.0
  %v2276 = vmax.f32 %v2249, 0.0
  %v2277 = vmax.f32 %v2251, 0.0
  %v2278 = vmax.f32 %v2254, 0.0
  %v2279 = vmax.f32 %v2256, 0.0
  %v2280 = vmax.f32 %v2259, 0.0
  %v2281 = vmax.f32 %v2261, 0.0
  %v2282 = vmax.f32 %v2264, 0.0
  %v2283 = vmax.f32 %v2266, 0.0
  %v2284 = vrot.slane %v2268, 7
  %v2285 = vrot.slane %v2269, 7
  %v2286 = vrot.slane %v2270, 7
  %v2287 = vrot.slane %v2271, 7
  %v2288 = vrot.slane %v2272, 7
  %v2289 = vrot.slane %v2273, 7
  %v2290 = vrot.slane %v2274, 7
  %v2291 = vrot.slane %v2275, 7
  %v2292 = vrot.slane %v2276, 7
  %v2293 = vrot.slane %v2277, 7
  %v2294 = vrot.slane %v2278, 7
  %v2295 = vrot.slane %v2279, 7
  %v2296 = vrot.slane %v2280, 7
  %v2297 = vrot.slane %v2281, 7
  %v2298 = vrot.slane %v2282, 7
  %v2299 = vrot.slane %v2283, 7
  %v2300 = vsel %vm538, %v2298, %v2299
  %v2301 = vsel %vm538, %v2297, %v2298
  %v2302 = vsel %vm538, %v2296, %v2297
  %v2303 = vsel %vm538, %v2295, %v2296
  %v2304 = vsel %vm538, %v2294, %v2295
  %v2305 = vsel %vm538, %v2293, %v2294
  %v2306 = vsel %vm538, %v2292, %v2293
  %v2307 = vsel %vm538, %v2291, %v2292
  %v2308 = vsel %vm538, %v2290, %v2291
  %v2309 = vsel %vm538, %v2289, %v2290
  %v2310 = vsel %vm538, %v2288, %v2289
  %v2311 = vsel %vm538, %v2287, %v2288
  %v2312 = vsel %vm538, %v2286, %v2287
  %v2313 = vsel %vm538, %v2285, %v2286
  %v2314 = vsel %vm538, %v2284, %v2285
  %v2315 = vsel %vm538, %v2299, %v2284
  %v2316 = vsel %vm619, %v2315, 0.0
  %v2317 = vsel %vm620, %v2314, 0.0
  %v2318 = vsel %vm621, %v2313, 0.0
  %v2319 = vsel %vm622, %v2312, 0.0
  %v2320 = vsel %vm623, %v2311, 0.0
  %v2321 = vsel %vm624, %v2310, 0.0
  %v2322 = vsel %vm625, %v2309, 0.0
  %v2323 = vsel %vm626, %v2308, 0.0
  %v2324 = vsel %vm627, %v2307, 0.0
  %v2325 = vsel %vm628, %v2306, 0.0
  %v2326 = vsel %vm629, %v2305, 0.0
  %v2327 = vsel %vm630, %v2304, 0.0
  %v2328 = vsel %vm631, %v2303, 0.0
  %v2329 = vsel %vm632, %v2302, 0.0
  %v2330 = vsel %vm633, %v2301, 0.0
  %v2331 = vsel %vm634, %v2300, 0.0
  %v2332 = vrot.slane %v2268, 1
  %v2333 = vrot.slane %v2269, 1
  %v2334 = vrot.slane %v2270, 1
  %v2335 = vrot.slane %v2271, 1
  %v2336 = vrot.slane %v2272, 1
  %v2337 = vrot.slane %v2273, 1
  %v2338 = vrot.slane %v2274, 1
  %v2339 = vrot.slane %v2275, 1
  %v2340 = vrot.slane %v2276, 1
  %v2341 = vrot.slane %v2277, 1
  %v2342 = vrot.slane %v2278, 1
  %v2343 = vrot.slane %v2279, 1
  %v2344 = vrot.slane %v2280, 1
  %v2345 = vrot.slane %v2281, 1
  %v2346 = vrot.slane %v2282, 1
  %v2347 = vrot.slane %v2283, 1
  %v2348 = vsel %vm667, %v2346, %v2347
  %v2349 = vsel %vm667, %v2345, %v2346
  %v2350 = vsel %vm667, %v2344, %v2345
  %v2351 = vsel %vm667, %v2343, %v2344
  %v2352 = vsel %vm667, %v2342, %v2343
  %v2353 = vsel %vm667, %v2341, %v2342
  %v2354 = vsel %vm667, %v2340, %v2341
  %v2355 = vsel %vm667, %v2339, %v2340
  %v2356 = vsel %vm667, %v2338, %v2339
  %v2357 = vsel %vm667, %v2337, %v2338
  %v2358 = vsel %vm667, %v2336, %v2337
  %v2359 = vsel %vm667, %v2335, %v2336
  %v2360 = vsel %vm667, %v2334, %v2335
  %v2361 = vsel %vm667, %v2333, %v2334
  %v2362 = vsel %vm667, %v2332, %v2333
  %v2363 = vsel %vm667, %v2347, %v2332
  %v2364 = vsel %vm748, %v2362, 0.0
  %v2365 = vsel %vm749, %v2361, 0.0
  %v2366 = vsel %vm750, %v2360, 0.0
  %v2367 = vsel %vm751, %v2359, 0.0
  %v2368 = vsel %vm752, %v2358, 0.0
  %v2369 = vsel %vm753, %v2357, 0.0
  %v2370 = vsel %vm754, %v2356, 0.0
  %v2371 = vsel %vm755, %v2355, 0.0
  %v2372 = vsel %vm756, %v2354, 0.0
  %v2373 = vsel %vm757, %v2353, 0.0
  %v2374 = vsel %vm758, %v2352, 0.0
  %v2375 = vsel %vm759, %v2351, 0.0
  %v2376 = vsel %vm760, %v2350, 0.0
  %v2377 = vsel %vm761, %v2349, 0.0
  %v2378 = vsel %vm762, %v2348, 0.0
  %v2379 = vsel %vm763, %v2363, 0.0
  %2396 = vrot.lane.b32.xlu0 %v2268, 16
  %v2397 = vpop.permute.xlu0 %2396
  %2398 = vrot.lane.b32.xlu0 %v2269, 16
  %v2399 = vpop.permute.xlu0 %2398
  %2400 = vrot.lane.b32.xlu0 %v2270, 16
  %v2401 = vpop.permute.xlu0 %2400
  %2402 = vrot.lane.b32.xlu0 %v2271, 16
  %v2403 = vpop.permute.xlu0 %2402
  %2404 = vrot.lane.b32.xlu0 %v2272, 16
  %v2405 = vpop.permute.xlu0 %2404
  %2406 = vrot.lane.b32.xlu0 %v2273, 16
  %v2407 = vpop.permute.xlu0 %2406
  %2408 = vrot.lane.b32.xlu0 %v2274, 16
  %v2409 = vpop.permute.xlu0 %2408
  %2410 = vrot.lane.b32.xlu0 %v2275, 16
  %v2411 = vpop.permute.xlu0 %2410
  %2412 = vrot.lane.b32.xlu0 %v2276, 16
  %v2413 = vpop.permute.xlu0 %2412
  %2414 = vrot.lane.b32.xlu0 %v2277, 16
  %v2415 = vpop.permute.xlu0 %2414
  %2416 = vrot.lane.b32.xlu0 %v2278, 16
  %v2417 = vpop.permute.xlu0 %2416
  %2418 = vrot.lane.b32.xlu0 %v2279, 16
  %v2419 = vpop.permute.xlu0 %2418
  %2420 = vrot.lane.b32.xlu0 %v2280, 16
  %v2421 = vpop.permute.xlu0 %2420
  %2422 = vrot.lane.b32.xlu0 %v2281, 16
  %v2423 = vpop.permute.xlu0 %2422
  %2424 = vrot.lane.b32.xlu0 %v2282, 16
  %v2425 = vpop.permute.xlu0 %2424
  %2426 = vrot.lane.b32.xlu0 %v2283, 16
  %v2427 = vpop.permute.xlu0 %2426
  %2460 = vrot.lane.b32.xlu0 %v2364, 32
  %v2461 = vpop.permute.xlu0 %2460
  %2462 = vrot.lane.b32.xlu0 %v2365, 32
  %v2463 = vpop.permute.xlu0 %2462
  %2464 = vrot.lane.b32.xlu0 %v2366, 32
  %v2465 = vpop.permute.xlu0 %2464
  %2466 = vrot.lane.b32.xlu0 %v2367, 32
  %v2467 = vpop.permute.xlu0 %2466
  %2468 = vrot.lane.b32.xlu0 %v2368, 32
  %v2469 = vpop.permute.xlu0 %2468
  %2470 = vrot.lane.b32.xlu0 %v2369, 32
  %v2471 = vpop.permute.xlu0 %2470
  %2472 = vrot.lane.b32.xlu0 %v2370, 32
  %v2473 = vpop.permute.xlu0 %2472
  %2474 = vrot.lane.b32.xlu0 %v2371, 32
  %v2475 = vpop.permute.xlu0 %2474
  %2476 = vrot.lane.b32.xlu0 %v2372, 32
  %v2477 = vpop.permute.xlu0 %2476
  %2478 = vrot.lane.b32.xlu0 %v2373, 32
  %v2479 = vpop.permute.xlu0 %2478
  %2480 = vrot.lane.b32.xlu0 %v2374, 32
  %v2481 = vpop.permute.xlu0 %2480
  %2482 = vrot.lane.b32.xlu0 %v2375, 32
  %v2483 = vpop.permute.xlu0 %2482
  %2484 = vrot.lane.b32.xlu0 %v2376, 32
  %v2485 = vpop.permute.xlu0 %2484
  %2486 = vrot.lane.b32.xlu0 %v2377, 32
  %v2487 = vpop.permute.xlu0 %2486
  %2488 = vrot.lane.b32.xlu0 %v2378, 32
  %v2489 = vpop.permute.xlu0 %2488
  %2490 = vrot.lane.b32.xlu0 %v2379, 32
  %v2491 = vpop.permute.xlu0 %2490
  %v2508 = vsel %vm1473, %v2316, %v2397
  %v2509 = vsel %vm1473, %v2317, %v2399
  %v2510 = vsel %vm1473, %v2318, %v2401
  %v2511 = vsel %vm1473, %v2319, %v2403
  %v2512 = vsel %vm1473, %v2320, %v2405
  %v2513 = vsel %vm1473, %v2321, %v2407
  %v2514 = vsel %vm1473, %v2322, %v2409
  %v2515 = vsel %vm1473, %v2323, %v2411
  %v2516 = vsel %vm1473, %v2324, %v2413
  %v2517 = vsel %vm1473, %v2325, %v2415
  %v2518 = vsel %vm1473, %v2326, %v2417
  %v2519 = vsel %vm1473, %v2327, %v2419
  %v2520 = vsel %vm1473, %v2328, %v2421
  %v2521 = vsel %vm1473, %v2329, %v2423
  %v2522 = vsel %vm1473, %v2330, %v2425
  %v2523 = vsel %vm1473, %v2331, %v2427
  %v2524 = vsel %vm2141, %v2508, %v2461
  %v2525 = vsel %vm2141, %v2509, %v2463
  %v2526 = vsel %vm2141, %v2510, %v2465
  %v2527 = vsel %vm2141, %v2511, %v2467
  %v2528 = vsel %vm2141, %v2512, %v2469
  %v2529 = vsel %vm2141, %v2513, %v2471
  %v2530 = vsel %vm2141, %v2514, %v2473
  %v2531 = vsel %vm2141, %v2515, %v2475
  %v2532 = vsel %vm2141, %v2516, %v2477
  %v2533 = vsel %vm2141, %v2517, %v2479
  %v2534 = vsel %vm2141, %v2518, %v2481
  %v2535 = vsel %vm2141, %v2519, %v2483
  %v2536 = vsel %vm2141, %v2520, %v2485
  %v2537 = vsel %vm2141, %v2521, %v2487
  %v2538 = vsel %vm2141, %v2522, %v2489
  %v2539 = vsel %vm2141, %v2523, %v2491
  %v2540 = vpack.c.bf16 %v2525, %v2524
  %v2541 = vpack.c.bf16 %v2527, %v2526
  %v2542 = vpack.c.bf16 %v2529, %v2528
  %v2543 = vpack.c.bf16 %v2531, %v2530
  %v2544 = vpack.c.bf16 %v2533, %v2532
  %v2545 = vpack.c.bf16 %v2535, %v2534
  %v2546 = vpack.c.bf16 %v2537, %v2536
  %v2547 = vpack.c.bf16 %v2539, %v2538
  %v2548 = vld [vmem:[%s5] sm:$0xf]
  %v2549 = vld [vmem:[%s5 + $0x4] sm:$0xf]
  %v2550 = vld [vmem:[%s5 + $0x8] sm:$0xf]
  %v2551 = vld [vmem:[%s5 + $0xc] sm:$0xf]
  %v2552 = vld [vmem:[%s5 + $0x10] sm:$0xf]
  %v2553 = vld [vmem:[%s5 + $0x14] sm:$0xf]
  %v2554 = vld [vmem:[%s6] sm:$0x1]
  %v2556 = vperm.slane %v2554, 0
  %v2564 = vunpack.c.l.b16 %v2548
  %v2565 = vunpack.c.l.b16 %v2549
  %v2566 = vunpack.c.l.b16 %v2550
  %v2567 = vunpack.c.l.b16 %v2551
  %v2568 = vunpack.c.l.b16 %v2552
  %v2569 = vunpack.c.l.b16 %v2553
  %v2570 = vpack.c.b16 %v2565, %v2564
  %v2571 = vpack.c.b16 %v2567, %v2566
  %v2572 = vpack.c.b16 %v2569, %v2568
  %vm2576 = vcmask 392192
  %v2578 = vsel %vm2576, %v2540, 0
  %v2581 = vsel %vm2576, %v2541, 0
  %v2584 = vsel %vm2576, %v2542, 0
  %v2587 = vsel %vm2576, %v2543, 0
  %v2590 = vsel %vm2576, %v2544, 0
  %v2593 = vsel %vm2576, %v2545, 0
  %v2596 = vsel %vm2576, %v2546, 0
  %v2599 = vsel %vm2576, %v2547, 0
  %2601 = vmatpush.bf16.msra.mxu0 0
  %2602 = vmatpush.bf16.msra.mxu0 0
  %2603 = vmatpush.bf16.msra.mxu0 0
  %2604 = vmatpush.bf16.msra.mxu0 0
  %2605 = vmatpush.bf16.msra.mxu0 0
  %2606 = vmatpush.bf16.msra.mxu0 %v2572
  %2607 = vmatpush.bf16.msra.mxu0 %v2571
  %2608 = vmatpush.bf16.msra.mxu0 %v2570
  %2609 = vmatmul.bf16.gmra.mxu0 %v2578
  %v2610 = vpop.f32.mrf.mxu0
  %v2611 = vadd.f32 %v2556, %v2610
  %v2612 = vpop.f32.mrf.mxu0
  %v2613 = vadd.f32 %v2556, %v2612
  %2614 = vmatmul.bf16.gmra.mxu0 %v2581
  %v2615 = vpop.f32.mrf.mxu0
  %v2616 = vadd.f32 %v2556, %v2615
  %v2617 = vpop.f32.mrf.mxu0
  %v2618 = vadd.f32 %v2556, %v2617
  %2619 = vmatmul.bf16.gmra.mxu0 %v2584
  %v2620 = vpop.f32.mrf.mxu0
  %v2621 = vadd.f32 %v2556, %v2620
  %v2622 = vpop.f32.mrf.mxu0
  %v2623 = vadd.f32 %v2556, %v2622
  %2624 = vmatmul.bf16.gmra.mxu0 %v2587
  %v2625 = vpop.f32.mrf.mxu0
  %v2626 = vadd.f32 %v2556, %v2625
  %v2627 = vpop.f32.mrf.mxu0
  %v2628 = vadd.f32 %v2556, %v2627
  %2629 = vmatmul.bf16.gmra.mxu0 %v2590
  %v2630 = vpop.f32.mrf.mxu0
  %v2631 = vadd.f32 %v2556, %v2630
  %v2632 = vpop.f32.mrf.mxu0
  %v2633 = vadd.f32 %v2556, %v2632
  %2634 = vmatmul.bf16.gmra.mxu0 %v2593
  %v2635 = vpop.f32.mrf.mxu0
  %v2636 = vadd.f32 %v2556, %v2635
  %v2637 = vpop.f32.mrf.mxu0
  %v2638 = vadd.f32 %v2556, %v2637
  %2639 = vmatmul.bf16.gmra.mxu0 %v2596
  %v2640 = vpop.f32.mrf.mxu0
  %v2641 = vadd.f32 %v2556, %v2640
  %v2642 = vpop.f32.mrf.mxu0
  %v2643 = vadd.f32 %v2556, %v2642
  %2644 = vmatmul.bf16.gmra.mxu0 %v2599
  %v2645 = vpop.f32.mrf.mxu0
  %v2646 = vadd.f32 %v2556, %v2645
  %v2647 = vpop.f32.mrf.mxu0
  %v2648 = vadd.f32 %v2556, %v2647
  %2649 = vdwg.mxu0
  %v2650 = vmax.f32 %v2611, 0.0
  %v2651 = vmax.f32 %v2613, 0.0
  %v2652 = vmax.f32 %v2616, 0.0
  %v2653 = vmax.f32 %v2618, 0.0
  %v2654 = vmax.f32 %v2621, 0.0
  %v2655 = vmax.f32 %v2623, 0.0
  %v2656 = vmax.f32 %v2626, 0.0
  %v2657 = vmax.f32 %v2628, 0.0
  %v2658 = vmax.f32 %v2631, 0.0
  %v2659 = vmax.f32 %v2633, 0.0
  %v2660 = vmax.f32 %v2636, 0.0
  %v2661 = vmax.f32 %v2638, 0.0
  %v2662 = vmax.f32 %v2641, 0.0
  %v2663 = vmax.f32 %v2643, 0.0
  %v2664 = vmax.f32 %v2646, 0.0
  %v2665 = vmax.f32 %v2648, 0.0
  %v2666 = vmax.f32 %v2650, %v2651
  %v2667 = vrot.slane %v2666, 4
  %v2668 = vmax.f32 %v2666, %v2667
  %v2669 = vrot.slane %v2668, 2
  %v2670 = vmax.f32 %v2668, %v2669
  %v2671 = vrot.slane %v2670, 1
  %v2672 = vmax.f32 %v2670, %v2671
  %v2673 = vmax.f32 %v2652, %v2653
  %v2674 = vrot.slane %v2673, 4
  %v2675 = vmax.f32 %v2673, %v2674
  %v2676 = vrot.slane %v2675, 2
  %v2677 = vmax.f32 %v2675, %v2676
  %v2678 = vrot.slane %v2677, 1
  %v2679 = vmax.f32 %v2677, %v2678
  %v2680 = vmax.f32 %v2654, %v2655
  %v2681 = vrot.slane %v2680, 4
  %v2682 = vmax.f32 %v2680, %v2681
  %v2683 = vrot.slane %v2682, 2
  %v2684 = vmax.f32 %v2682, %v2683
  %v2685 = vrot.slane %v2684, 1
  %v2686 = vmax.f32 %v2684, %v2685
  %v2687 = vmax.f32 %v2656, %v2657
  %v2688 = vrot.slane %v2687, 4
  %v2689 = vmax.f32 %v2687, %v2688
  %v2690 = vrot.slane %v2689, 2
  %v2691 = vmax.f32 %v2689, %v2690
  %v2692 = vrot.slane %v2691, 1
  %v2693 = vmax.f32 %v2691, %v2692
  %v2694 = vmax.f32 %v2658, %v2659
  %v2695 = vrot.slane %v2694, 4
  %v2696 = vmax.f32 %v2694, %v2695
  %v2697 = vrot.slane %v2696, 2
  %v2698 = vmax.f32 %v2696, %v2697
  %v2699 = vrot.slane %v2698, 1
  %v2700 = vmax.f32 %v2698, %v2699
  %v2701 = vmax.f32 %v2660, %v2661
  %v2702 = vrot.slane %v2701, 4
  %v2703 = vmax.f32 %v2701, %v2702
  %v2704 = vrot.slane %v2703, 2
  %v2705 = vmax.f32 %v2703, %v2704
  %v2706 = vrot.slane %v2705, 1
  %v2707 = vmax.f32 %v2705, %v2706
  %v2708 = vmax.f32 %v2662, %v2663
  %v2709 = vrot.slane %v2708, 4
  %v2710 = vmax.f32 %v2708, %v2709
  %v2711 = vrot.slane %v2710, 2
  %v2712 = vmax.f32 %v2710, %v2711
  %v2713 = vrot.slane %v2712, 1
  %v2714 = vmax.f32 %v2712, %v2713
  %v2715 = vmax.f32 %v2664, %v2665
  %v2716 = vrot.slane %v2715, 4
  %v2717 = vmax.f32 %v2715, %v2716
  %v2718 = vrot.slane %v2717, 2
  %v2719 = vmax.f32 %v2717, %v2718
  %v2720 = vrot.slane %v2719, 1
  %v2721 = vmax.f32 %v2719, %v2720
  %v2722 = vpack.c.bf16 %v2672, %v2672
  %v2723 = vpack.c.bf16 %v2679, %v2679
  %v2724 = vpack.c.bf16 %v2686, %v2686
  %v2725 = vpack.c.bf16 %v2693, %v2693
  %v2726 = vpack.c.bf16 %v2700, %v2700
  %v2727 = vpack.c.bf16 %v2707, %v2707
  %v2728 = vpack.c.bf16 %v2714, %v2714
  %v2729 = vpack.c.bf16 %v2721, %v2721
  %v2730 = vld [vmem:[%s7] sm:$0xf]
  %v2731 = vld [vmem:[%s7 + $0x4] sm:$0xf]
  %v2732 = vld [vmem:[%s7 + $0x8] sm:$0xf]
  %v2733 = vld [vmem:[%s7 + $0xc] sm:$0xf]
  %v2734 = vld [vmem:[%s7 + $0x10] sm:$0xf]
  %v2735 = vld [vmem:[%s7 + $0x14] sm:$0xf]
  %v2736 = vld [vmem:[%s7 + $0x18] sm:$0xf]
  %v2737 = vld [vmem:[%s7 + $0x1c] sm:$0xf]
  %v2738 = vld [vmem:[%s7 + $0x20] sm:$0xf]
  %v2739 = vld [vmem:[%s7 + $0x24] sm:$0xf]
  %v2740 = vld [vmem:[%s7 + $0x28] sm:$0xf]
  %v2741 = vld [vmem:[%s7 + $0x2c] sm:$0xf]
  %v2742 = vld [vmem:[%s7 + $0x30] sm:$0xf]
  %v2743 = vld [vmem:[%s7 + $0x34] sm:$0xf]
  %v2744 = vld [vmem:[%s7 + $0x38] sm:$0xf]
  %v2745 = vld [vmem:[%s7 + $0x3c] sm:$0xf]
  %v2746 = vld [vmem:[%s8] sm:$0x1]
  %v2748 = vperm.slane %v2746, 0
  %v2758 = vunpack.c.l.b16 %v2722
  %v2759 = vunpack.c.l.b16 %v2723
  %v2760 = vunpack.c.l.b16 %v2724
  %v2761 = vunpack.c.l.b16 %v2725
  %v2762 = vunpack.c.l.b16 %v2726
  %v2763 = vunpack.c.l.b16 %v2727
  %v2764 = vunpack.c.l.b16 %v2728
  %v2765 = vunpack.c.l.b16 %v2729
  %vm2766 = vcmask 1041409
  %v2767 = vsel %vm2766, %v2759, %v2758
  %vm2768 = vcmask 1042434
  %v2769 = vsel %vm2768, %v2760, %v2767
  %vm2770 = vcmask 1043459
  %v2771 = vsel %vm2770, %v2761, %v2769
  %vm2772 = vcmask 1044484
  %v2773 = vsel %vm2772, %v2762, %v2771
  %vm2774 = vcmask 1045509
  %v2775 = vsel %vm2774, %v2763, %v2773
  %vm2776 = vcmask 1046534
  %v2777 = vsel %vm2776, %v2764, %v2775
  %vm2778 = vcmask 1047559
  %v2779 = vsel %vm2778, %v2765, %v2777
  %v2780 = vpack.c.b16 %v2779, %v2779
  %v2798 = vunpack.c.l.b16 %v2730
  %v2799 = vunpack.c.l.b16 %v2731
  %v2800 = vunpack.c.l.b16 %v2732
  %v2801 = vunpack.c.l.b16 %v2733
  %v2802 = vunpack.c.l.b16 %v2734
  %v2803 = vunpack.c.l.b16 %v2735
  %v2804 = vunpack.c.l.b16 %v2736
  %v2805 = vunpack.c.l.b16 %v2737
  %v2806 = vunpack.c.l.b16 %v2738
  %v2807 = vunpack.c.l.b16 %v2739
  %v2808 = vunpack.c.l.b16 %v2740
  %v2809 = vunpack.c.l.b16 %v2741
  %v2810 = vunpack.c.l.b16 %v2742
  %v2811 = vunpack.c.l.b16 %v2743
  %v2812 = vunpack.c.l.b16 %v2744
  %v2813 = vunpack.c.l.b16 %v2745
  %v2814 = vpack.c.b16 %v2799, %v2798
  %v2815 = vpack.c.b16 %v2801, %v2800
  %v2816 = vpack.c.b16 %v2803, %v2802
  %v2817 = vpack.c.b16 %v2805, %v2804
  %v2818 = vpack.c.b16 %v2807, %v2806
  %v2819 = vpack.c.b16 %v2809, %v2808
  %v2820 = vpack.c.b16 %v2811, %v2810
  %v2821 = vpack.c.b16 %v2813, %v2812
  %2830 = vmatpush.bf16.msra.mxu0 %v2821
  %2831 = vmatpush.bf16.msra.mxu0 %v2820
  %2832 = vmatpush.bf16.msra.mxu0 %v2819
  %2833 = vmatpush.bf16.msra.mxu0 %v2818
  %2834 = vmatpush.bf16.msra.mxu0 %v2817
  %2835 = vmatpush.bf16.msra.mxu0 %v2816
  %2836 = vmatpush.bf16.msra.mxu0 %v2815
  %2837 = vmatpush.bf16.msra.mxu0 %v2814
  %2838 = vmatmul.bf16.gmra.mxu0 %v2780
  %v2839 = vpop.f32.mrf.mxu0
  %v2840 = vadd.f32 %v2748, %v2839
  %v2841 = vpop.f32.mrf.mxu0
  %2842 = vdwg.mxu0
  %v2843 = vmax.f32 %v2840, 0.0
  %v2844 = vpack.c.bf16 %v2843, %v2843
  %v2845 = vld [vmem:[%s9] sm:$0xf]
  %v2846 = vld [vmem:[%s9 + $0x4] sm:$0xf]
  %v2847 = vld [vmem:[%s9 + $0x8] sm:$0xf]
  %v2848 = vld [vmem:[%s9 + $0xc] sm:$0xf]
  %v2849 = vld [vmem:[%s9 + $0x10] sm:$0xf]
  %v2850 = vld [vmem:[%s9 + $0x14] sm:$0xf]
  %v2851 = vld [vmem:[%s9 + $0x18] sm:$0xf]
  %v2852 = vld [vmem:[%s9 + $0x1c] sm:$0xf]
  %v2853 = vld [vmem:[%s10] sm:$0x1]
  %v2855 = vperm.slane %v2853, 0
  %v2865 = vunpack.c.l.b16 %v2845
  %v2866 = vunpack.c.l.b16 %v2846
  %v2867 = vunpack.c.l.b16 %v2847
  %v2868 = vunpack.c.l.b16 %v2848
  %v2869 = vunpack.c.l.b16 %v2849
  %v2870 = vunpack.c.l.b16 %v2850
  %v2871 = vunpack.c.l.b16 %v2851
  %v2872 = vunpack.c.l.b16 %v2852
  %v2873 = vpack.c.b16 %v2866, %v2865
  %v2874 = vpack.c.b16 %v2868, %v2867
  %v2875 = vpack.c.b16 %v2870, %v2869
  %v2876 = vpack.c.b16 %v2872, %v2871
  %vm2881 = vcmask 523264
  %v2883 = vsel %vm2881, %v2844, 0
  %2885 = vmatpush.bf16.msra.mxu0 0
  %2886 = vmatpush.bf16.msra.mxu0 0
  %2887 = vmatpush.bf16.msra.mxu0 0
  %2888 = vmatpush.bf16.msra.mxu0 0
  %2889 = vmatpush.bf16.msra.mxu0 %v2876
  %2890 = vmatpush.bf16.msra.mxu0 %v2875
  %2891 = vmatpush.bf16.msra.mxu0 %v2874
  %2892 = vmatpush.bf16.msra.mxu0 %v2873
  %2893 = vmatmul.bf16.gmra.mxu0 %v2883
  %v2894 = vpop.f32.mrf.mxu0
  %v2895 = vadd.f32 %v2855, %v2894
  %v2896 = vpop.f32.mrf.mxu0
  %2897 = vdwg.mxu0
  %2898 = vst.msk [vmem:[%s11] sm:$0xff] %vm2881, %v2843
  %2900 = vrot.lane.b32.xlu0 %v2895, 64
  %v2901 = vpop.permute.xlu0 %2900
  %vm2903 = vcmask 1048064
  %2904 = vst.msk [vmem:[%s11] sm:$0xff] %vm2903, %v2901
  // Predicated region
  $region46: #{fcn_forward.1} parent=0 // pred_check
    _
  $region47: #{fcn_forward.1} parent=0 // pred_check_branch
    %2906 = sbr.rel (0) target = $region49
  $region48: #{fcn_forward.1} parent=0 // pred_region
    _
  $region49: #{fcn_forward.1} parent=0 // pred_fallthru
    _
  // Predicated region
  $region50: #{fcn_forward.1} parent=0 // pred_check
    _
  $region51: #{fcn_forward.1} parent=0 // pred_check_branch
    %2908 = sbr.rel (0) target = $region53
  $region52: #{fcn_forward.1} parent=0 // pred_region
    _
  $region53: #{fcn_forward.1} parent=0 // pred_fallthru
    _

</llo_original>
